<compile_context>
chip_gen: v7x
topology: tpu7x:2x2x1
jax: 0.10.0
libtpu: 0.0.40
codegen_flags: <defaults>
</compile_context>

<pallas_src>
import functools
import math

import jax
import jax.numpy as jnp
from jax.experimental import pallas as pl
from jax.experimental.pallas import tpu as pltpu

LN_EPS = 1e-5                       # PyTorch nn.LayerNorm default
_INV_SQRT2 = 1.0 / math.sqrt(2.0)


def _round_up(v, m):
    return ((v + m - 1) // m) * m


def _layer_norm(x, w, b):
    mean = jnp.mean(x, axis=-1, keepdims=True)
    var = jnp.mean((x - mean) ** 2, axis=-1, keepdims=True)
    return (x - mean) * jax.lax.rsqrt(var + LN_EPS) * w + b


def _gelu(x):
    # exact GELU (PyTorch nn.GELU default)
    return 0.5 * x * (1.0 + jax.lax.erf(x * _INV_SQRT2))


# ---------------------------------------------------------------------------
# One fused kernel: grid = (batch, layer).  At layer step 0 the positional
# grouped conv + residual + LayerNorm seeds the persistent activation scratch;
# every step then runs one post-LN TransformerSentenceEncoderLayer and writes
# its hidden tap / head-averaged attention map.
# ---------------------------------------------------------------------------
def fused_encoder_kernel(
        xpad_ref,                                      # (1, Tpad, C) f32
        convw_ref, convb_ref, pclnw_ref, pclnb_ref,    # conv + post-conv LN
        wqkv_ref, bqkv_ref, wo_ref, bo_ref,            # attention (per layer)
        ln1w_ref, ln1b_ref, w1_ref, b1_ref, w2_ref, b2_ref, ln2w_ref, ln2b_ref,
        final_ref, taps_ref, *opt,
        num_heads, seq_len, conv_pos, conv_groups, embed_dim):
    if len(opt) == 2:
        attn_ref, h_scratch = opt
    else:
        attn_ref = None
        (h_scratch,) = opt

    l = pl.program_id(1)
    T, K, G, H, C = seq_len, conv_pos, conv_groups, num_heads, embed_dim
    Cg = C // G
    Dh = C // H
    pad = K // 2

    # ------------------------------------------------------------------ conv
    # Grouped pos-conv + SamePad trim + GELU + residual + LayerNorm, computed
    # once per batch element (first layer step).  K accumulated (T,Cg)x(Cg,Cg)
    # matmuls per group -> no K-way lane concatenation copies.
    @pl.when(l == 0)
    def _():
        xp = xpad_ref[0]                                       # (Tpad, C) f32
        group_out = []
        for g in range(G):                                     # static unroll
            acc = jnp.zeros((T, Cg), jnp.float32)
            for k in range(K):                                 # static unroll
                xk = xp[k:k + T, g * Cg:(g + 1) * Cg].astype(jnp.bfloat16)
                acc = acc + jnp.dot(xk, convw_ref[g, k],
                                    preferred_element_type=jnp.float32)
            group_out.append(acc)
        conv = jnp.concatenate(group_out, axis=-1) if G > 1 else group_out[0]
        conv = _gelu(conv + convb_ref[...])                    # (T, C)
        # residual = unpadded input rows; SamePad trim is implicit (output row
        # t uses padded rows t..t+K-1).
        x_res = xp[pad:pad + T, :]
        # not layer_norm_first -> post-conv LayerNorm
        h_scratch[...] = _layer_norm(x_res + conv, pclnw_ref[...], pclnb_ref[...])

    # -------------------------------------------- encoder layer l (post-LN)
    x = h_scratch[...]                                         # (T, C) f32
    xb = x.astype(jnp.bfloat16)

    # Fused QKV projection: one (T, C) x (C, 3C zero-padded to 128) matmul.
    # fairseq's q scaling (Dh**-0.5) is folded into wq / bq wrapper-side.
    qkv = jnp.dot(xb, wqkv_ref[0], preferred_element_type=jnp.float32) + bqkv_ref[0]
    q = qkv[:, 0:C]
    k_ = qkv[:, C:2 * C]
    v_ = qkv[:, 2 * C:3 * C]

    # Head split: (T, C) -> (H, T, Dh) via static lane slices + stack.
    qh = jnp.stack([q[:, h * Dh:(h + 1) * Dh] for h in range(H)], axis=0)
    kh = jnp.stack([k_[:, h * Dh:(h + 1) * Dh] for h in range(H)], axis=0)
    vh = jnp.stack([v_[:, h * Dh:(h + 1) * Dh] for h in range(H)], axis=0)
    qh = qh.astype(jnp.bfloat16)
    kh = kh.astype(jnp.bfloat16)
    vh = vh.astype(jnp.bfloat16)

    # Head-batched attention (B handled by the grid, so no in-kernel B loop).
    s = jnp.einsum('htd,hsd->hts', qh, kh,
                   preferred_element_type=jnp.float32)         # (H, T, T) f32
    s = s - jnp.max(s, axis=-1, keepdims=True)
    e = jnp.exp(s)
    p = e * pl.reciprocal(jnp.sum(e, axis=-1, keepdims=True), approx=True)
    if attn_ref is not None:
        # fairseq MultiheadAttention averages attention weights over heads
        attn_ref[0, 0] = (jnp.sum(p, axis=0) * (1.0 / H)).astype(attn_ref.dtype)

    ctx = jnp.einsum('hts,hsd->htd', p.astype(jnp.bfloat16), vh,
                     preferred_element_type=jnp.float32)       # (H, T, Dh) f32
    ctx_flat = jnp.concatenate([ctx[h] for h in range(H)], axis=-1)   # (T, C)

    # Output projection: single (T, C) x (C, C) matmul against unsplit wo.
    sa = jnp.dot(ctx_flat.astype(jnp.bfloat16), wo_ref[0],
                 preferred_element_type=jnp.float32) + bo_ref[0]

    x1 = _layer_norm(x + sa, ln1w_ref[0], ln1b_ref[0])         # self_attn_layer_norm
    h1 = jnp.dot(x1.astype(jnp.bfloat16), w1_ref[0],
                 preferred_element_type=jnp.float32) + b1_ref[0]
    h1 = jnp.maximum(h1, 0.0)                                  # relu(fc1); F zero-padded
    h2 = jnp.dot(h1.astype(jnp.bfloat16), w2_ref[0],
                 preferred_element_type=jnp.float32) + b2_ref[0]   # fc2
    y = _layer_norm(x1 + h2, ln2w_ref[0], ln2b_ref[0])         # final_layer_norm

    h_scratch[...] = y                                         # carried to layer l+1
    taps_ref[0, 0] = y.astype(taps_ref.dtype)                  # bf16 hidden tap
    final_ref[0] = y                                           # f32 final features


# ---------------------------------------------------------------------------
# Python wrapper: one pallas_call for the whole forward.
# ---------------------------------------------------------------------------
def transformer_encoder_forward(x, params, *, num_heads, conv_pos, conv_groups,
                                get_hidden=True, need_attn=True):
    B, T, C = x.shape
    L = params["wqkv"].shape[0]
    QKVp = params["wqkv"].shape[-1]
    Fp = params["w1"].shape[-1]
    G, K = conv_groups, conv_pos
    Cg = C // G
    Dh = C // num_heads
    pad = K // 2
    Tpad = T + 2 * pad

    # TODO(synk): the conv halo pad is materialized by the wrapper; at
    #             production T build it in-kernel from the unpadded ref.
    x_pad = jnp.pad(x, ((0, 0), (pad, pad), (0, 0)))

    kernel = functools.partial(
        fused_encoder_kernel, num_heads=num_heads, seq_len=T, conv_pos=K,
        conv_groups=G, embed_dim=C)

    in_specs = [
        pl.BlockSpec((1, Tpad, C), lambda b, l: (b, 0, 0)),           # x_pad
        pl.BlockSpec((G, K, Cg, Cg), lambda b, l: (0, 0, 0, 0)),      # conv_w
        pl.BlockSpec((1, C), lambda b, l: (0, 0)),                    # conv_b
        pl.BlockSpec((1, C), lambda b, l: (0, 0)),                    # post-conv ln w
        pl.BlockSpec((1, C), lambda b, l: (0, 0)),                    # post-conv ln b
        pl.BlockSpec((1, C, QKVp), lambda b, l: (l, 0, 0)),           # wqkv
        pl.BlockSpec((1, 1, QKVp), lambda b, l: (l, 0, 0)),           # bqkv
        pl.BlockSpec((1, C, C), lambda b, l: (l, 0, 0)),              # wo
        pl.BlockSpec((1, 1, C), lambda b, l: (l, 0, 0)),              # bo
        pl.BlockSpec((1, 1, C), lambda b, l: (l, 0, 0)),              # ln1 w
        pl.BlockSpec((1, 1, C), lambda b, l: (l, 0, 0)),              # ln1 b
        pl.BlockSpec((1, C, Fp), lambda b, l: (l, 0, 0)),             # w1
        pl.BlockSpec((1, 1, Fp), lambda b, l: (l, 0, 0)),             # b1
        pl.BlockSpec((1, Fp, C), lambda b, l: (l, 0, 0)),             # w2
        pl.BlockSpec((1, 1, C), lambda b, l: (l, 0, 0)),              # b2
        pl.BlockSpec((1, 1, C), lambda b, l: (l, 0, 0)),              # ln2 w
        pl.BlockSpec((1, 1, C), lambda b, l: (l, 0, 0)),              # ln2 b
    ]

    out_shape = [
        jax.ShapeDtypeStruct((B, T, C), jnp.float32),                 # final
        jax.ShapeDtypeStruct((B, L, T, C), jnp.bfloat16),             # hidden taps
    ]
    out_specs = [
        pl.BlockSpec((1, T, C), lambda b, l: (b, 0, 0)),
        pl.BlockSpec((1, 1, T, C), lambda b, l: (b, l, 0, 0)),
    ]
    if need_attn:
        out_shape.append(jax.ShapeDtypeStruct((B, L, T, T), jnp.bfloat16))
        out_specs.append(pl.BlockSpec((1, 1, T, T), lambda b, l: (b, l, 0, 0)))

    # Advisory cost estimate (flops / transcendentals / bytes).
    flops_layer = 2 * T * (C * QKVp + C * C + 2 * C * Fp) + 4 * num_heads * T * T * Dh
    flops_conv = 2 * T * K * Cg * Cg * G
    flops = B * (L * flops_layer + flops_conv)
    transcendentals = B * (L * (num_heads * T * T + 4 * T) + T * C + T)
    in_arrays = [x_pad, params["conv_w"], params["conv_b"], params["ln_w"],
                 params["ln_b"], params["wqkv"], params["bqkv"], params["wo"],
                 params["bo"], params["ln1_w"], params["ln1_b"], params["w1"],
                 params["b1"], params["w2"], params["b2"], params["ln2_w"],
                 params["ln2_b"]]
    bytes_accessed = sum(int(a.size) * a.dtype.itemsize for a in in_arrays)
    bytes_accessed += sum(math.prod(s.shape) * jnp.dtype(s.dtype).itemsize
                          for s in out_shape)

    results = pl.pallas_call(
        kernel,
        out_shape=tuple(out_shape),
        grid_spec=pltpu.PrefetchScalarGridSpec(
            num_scalar_prefetch=0,
            grid=(B, L),
            in_specs=in_specs,
            out_specs=tuple(out_specs),
            scratch_shapes=[pltpu.VMEM((T, C), jnp.float32)],   # carried activation
        ),
        compiler_params=pltpu.CompilerParams(
            dimension_semantics=("parallel", "arbitrary"),
            vmem_limit_bytes=32 * 1024 * 1024),
        cost_estimate=pl.CostEstimate(flops=flops,
                                      transcendentals=transcendentals,
                                      bytes_accessed=bytes_accessed),
    )(x_pad, params["conv_w"], params["conv_b"], params["ln_w"], params["ln_b"],
      params["wqkv"], params["bqkv"], params["wo"], params["bo"],
      params["ln1_w"], params["ln1_b"], params["w1"], params["b1"],
      params["w2"], params["b2"], params["ln2_w"], params["ln2_b"])

    final = results[0]
    taps = results[1]
    attn = results[2] if need_attn else None

    layer_results = [taps[:, l] for l in range(L)] if get_hidden else []
    attn_results = ([attn[:, l] for l in range(L)]
                    if (get_hidden and need_attn) else [])
    # layer_norm_first=False -> no trailing LayerNorm in forward()
    return final, layer_results, attn_results


# ---------------------------------------------------------------------------
# Deterministic synthetic parameter initialization (matches module shapes).
# ---------------------------------------------------------------------------
def init_params(key, C, F, num_layers, num_heads, conv_pos, conv_groups):
    H, G, K = num_heads, conv_groups, conv_pos
    Dh, Cg = C // H, C // G
    QKV = 3 * C
    QKVp = _round_up(QKV, 128)       # pad QKV N dim to the 128-lane boundary
    Fp = _round_up(F, 128)           # pad FFN width with zero columns/rows
    scale = 1.0 / math.sqrt(Dh)

    keys = jax.random.split(key, 1 + num_layers)

    # torch grouped conv weight: (C_out=C, C//groups, K); weight_norm(dim=2)
    # leaves the effective weight equal to the raw weight at init.
    conv_std = math.sqrt(4.0 / (conv_pos * C))
    w_raw = conv_std * jax.random.normal(keys[0], (C, Cg, K), dtype=jnp.float32)
    blocks = []
    for g in range(G):
        blk = w_raw[g * Cg:(g + 1) * Cg]                  # (Cg_out, Cg_in, K)
        blocks.append(jnp.transpose(blk, (2, 1, 0)))      # (K, Cg_in, Cg_out)
    conv_w = jnp.stack(blocks, axis=0).astype(jnp.bfloat16)   # (G, K, Cg, Cg)

    def lin(k, shp):
        return 0.02 * jax.random.normal(k, shp, dtype=jnp.float32)  # init_bert_params

    stacks = {n: [] for n in ("wqkv", "bqkv", "wo", "bo", "ln1_w", "ln1_b",
                              "w1", "b1", "w2", "b2", "ln2_w", "ln2_b")}
    for i in range(num_layers):
        lk = jax.random.split(keys[1 + i], 6)
        wq, wk, wv, wo = (lin(lk[j], (C, C)) for j in range(4))
        # fused q|k|v with the fairseq q scaling folded in; zero-pad to QKVp
        wqkv = jnp.concatenate([wq * scale, wk, wv], axis=1)
        wqkv = jnp.pad(wqkv, ((0, 0), (0, QKVp - QKV)))
        w1 = jnp.pad(lin(lk[4], (C, F)), ((0, 0), (0, Fp - F)))
        w2 = jnp.pad(lin(lk[5], (F, C)), ((0, Fp - F), (0, 0)))
        stacks["wqkv"].append(wqkv.astype(jnp.bfloat16))
        stacks["bqkv"].append(jnp.zeros((1, QKVp), jnp.float32))
        stacks["wo"].append(wo.astype(jnp.bfloat16))
        stacks["bo"].append(jnp.zeros((1, C), jnp.float32))
        stacks["ln1_w"].append(jnp.ones((1, C), jnp.float32))
        stacks["ln1_b"].append(jnp.zeros((1, C), jnp.float32))
        stacks["w1"].append(w1.astype(jnp.bfloat16))
        stacks["b1"].append(jnp.zeros((1, Fp), jnp.float32))
        stacks["w2"].append(w2.astype(jnp.bfloat16))
        stacks["b2"].append(jnp.zeros((1, C), jnp.float32))
        stacks["ln2_w"].append(jnp.ones((1, C), jnp.float32))
        stacks["ln2_b"].append(jnp.zeros((1, C), jnp.float32))

    params = {
        "conv_w": conv_w,
        "conv_b": jnp.zeros((1, C), jnp.float32),
        "ln_w": jnp.ones((1, C), jnp.float32),
        "ln_b": jnp.zeros((1, C), jnp.float32),
    }
    for n, lst in stacks.items():
        params[n] = jnp.stack(lst, axis=0)
    return params


if __name__ == "__main__":
    # Small config consistent with the module's forward:
    #   encoder_embed_dim=32, encoder_ffn_embed_dim=64, encoder_attention_heads=4,
    #   encoder_layers=2, conv_pos=4, conv_pos_groups=2, layer_norm_first=False,
    #   attention_type='original', extractor_mode='default', dropout=0 (eval).
    B, T, C = 2, 8, 32
    F = 64
    H = 4
    LAYERS = 2
    CONV_POS = 4
    CONV_GROUPS = 2

    key = jax.random.PRNGKey(0)
    kx, kp = jax.random.split(key)
    x = jax.random.normal(kx, (B, T, C), dtype=jnp.float32)
    params = init_params(kp, C, F, LAYERS, H, CONV_POS, CONV_GROUPS)

    out, layer_results, attn_results = transformer_encoder_forward(
        x, params, num_heads=H, conv_pos=CONV_POS, conv_groups=CONV_GROUPS,
        get_hidden=True, need_attn=True)

    out = jax.block_until_ready(out)
    for h in layer_results:
        jax.block_until_ready(h)
    for a in attn_results:
        jax.block_until_ready(a)

    assert out.shape == (B, T, C)
    assert len(layer_results) == LAYERS and layer_results[0].shape == (B, T, C)
    assert len(attn_results) == LAYERS and attn_results[0].shape == (B, T, T)
    assert bool(jnp.all(jnp.isfinite(out)))
    # attention rows must (approximately) sum to one; loose tolerance for the
    # approx-reciprocal softmax denominator and bf16 storage of the maps
    row_sums = jnp.sum(attn_results[0].astype(jnp.float32), axis=-1)
    assert bool(jnp.all(jnp.abs(row_sums - 1.0) < 5e-2))
    # the f32 final features must match the last bf16 hidden tap
    assert bool(jnp.all(jnp.abs(out - layer_results[-1].astype(jnp.float32)) < 1e-1))
    print("KERNEL_OK")
</pallas_src>

<mosaic_0001>
module attributes {stable_mosaic.version = 11 : i64} {
  func.func @fused_encoder_kernel(%arg0: i32, %arg1: i32, %arg2: memref<1x12x32xf32, #tpu.memory_space<vmem>>, %arg3: memref<2x4x16x16xbf16, #tpu.memory_space<vmem>>, %arg4: memref<1x32xf32, #tpu.memory_space<vmem>>, %arg5: memref<1x32xf32, #tpu.memory_space<vmem>>, %arg6: memref<1x32xf32, #tpu.memory_space<vmem>>, %arg7: memref<1x32x128xbf16, #tpu.memory_space<vmem>>, %arg8: memref<1x1x128xf32, #tpu.memory_space<vmem>>, %arg9: memref<1x32x32xbf16, #tpu.memory_space<vmem>>, %arg10: memref<1x1x32xf32, #tpu.memory_space<vmem>>, %arg11: memref<1x1x32xf32, #tpu.memory_space<vmem>>, %arg12: memref<1x1x32xf32, #tpu.memory_space<vmem>>, %arg13: memref<1x32x128xbf16, #tpu.memory_space<vmem>>, %arg14: memref<1x1x128xf32, #tpu.memory_space<vmem>>, %arg15: memref<1x128x32xbf16, #tpu.memory_space<vmem>>, %arg16: memref<1x1x32xf32, #tpu.memory_space<vmem>>, %arg17: memref<1x1x32xf32, #tpu.memory_space<vmem>>, %arg18: memref<1x1x32xf32, #tpu.memory_space<vmem>>, %arg19: memref<1x8x32xf32, #tpu.memory_space<vmem>>, %arg20: memref<1x1x8x32xbf16, #tpu.memory_space<vmem>>, %arg21: memref<1x1x8x8xbf16, #tpu.memory_space<vmem>>, %arg22: memref<8x32xf32, #tpu.memory_space<vmem>>) attributes {dimension_semantics = [#tpu.dimension_semantics<parallel>, #tpu.dimension_semantics<arbitrary>], iteration_bounds = array<i64: 2, 2>, scalar_prefetch = 0 : i64, scratch_operands = 1 : i64, tpu.core_type = #tpu.core_type<tc>, window_params = [{transform_indices = @transform_0, window_bounds = array<i64: 1, 12, 32>}, {pipeline_mode = #tpu.pipeline_mode<synchronous>, transform_indices = @transform_1, window_bounds = array<i64: 2, 4, 16, 16>}, {pipeline_mode = #tpu.pipeline_mode<synchronous>, transform_indices = @transform_2, window_bounds = array<i64: 1, 32>}, {pipeline_mode = #tpu.pipeline_mode<synchronous>, transform_indices = @transform_3, window_bounds = array<i64: 1, 32>}, {pipeline_mode = #tpu.pipeline_mode<synchronous>, transform_indices = @transform_4, window_bounds = array<i64: 1, 32>}, {transform_indices = @transform_5, window_bounds = array<i64: 1, 32, 128>}, {transform_indices = @transform_6, window_bounds = array<i64: 1, 1, 128>}, {transform_indices = @transform_7, window_bounds = array<i64: 1, 32, 32>}, {transform_indices = @transform_8, window_bounds = array<i64: 1, 1, 32>}, {transform_indices = @transform_9, window_bounds = array<i64: 1, 1, 32>}, {transform_indices = @transform_10, window_bounds = array<i64: 1, 1, 32>}, {transform_indices = @transform_11, window_bounds = array<i64: 1, 32, 128>}, {transform_indices = @transform_12, window_bounds = array<i64: 1, 1, 128>}, {transform_indices = @transform_13, window_bounds = array<i64: 1, 128, 32>}, {transform_indices = @transform_14, window_bounds = array<i64: 1, 1, 32>}, {transform_indices = @transform_15, window_bounds = array<i64: 1, 1, 32>}, {transform_indices = @transform_16, window_bounds = array<i64: 1, 1, 32>}, {transform_indices = @transform_17, window_bounds = array<i64: 1, 8, 32>}, {transform_indices = @transform_18, window_bounds = array<i64: 1, 1, 8, 32>}, {transform_indices = @transform_19, window_bounds = array<i64: 1, 1, 8, 8>}]} {
    %c0_i32 = arith.constant 0 : i32
    %0 = arith.cmpi eq, %arg1, %c0_i32 : i32
    %1 = arith.extui %0 : i1 to i32
    %c0_i32_0 = arith.constant 0 : i32
    %2 = arith.cmpi ne, %1, %c0_i32_0 : i32
    scf.if %2 {
      %c0_71 = arith.constant 0 : index
      %c0_72 = arith.constant 0 : index
      %c0_73 = arith.constant 0 : index
      %162 = vector.load %arg2[%c0_71, %c0_72, %c0_73] : memref<1x12x32xf32, #tpu.memory_space<vmem>>, vector<1x12x32xf32>
      %163 = vector.shape_cast %162 : vector<1x12x32xf32> to vector<12x32xf32>
      %cst_74 = arith.constant 0.000000e+00 : f32
      %164 = vector.broadcast %cst_74 : f32 to vector<8x16xf32>
      %165 = vector.extract_strided_slice %163 {offsets = [0, 0], sizes = [8, 16], strides = [1, 1]} : vector<12x32xf32> to vector<8x16xf32>
      %166 = arith.truncf %165 : vector<8x16xf32> to vector<8x16xbf16>
      %c0_75 = arith.constant 0 : index
      %c0_76 = arith.constant 0 : index
      %c0_77 = arith.constant 0 : index
      %c0_78 = arith.constant 0 : index
      %167 = vector.load %arg3[%c0_75, %c0_76, %c0_77, %c0_78] : memref<2x4x16x16xbf16, #tpu.memory_space<vmem>>, vector<1x1x16x16xbf16>
      %168 = vector.shape_cast %167 : vector<1x1x16x16xbf16> to vector<16x16xbf16>
      %cst_79 = arith.constant dense<0.000000e+00> : vector<8x16xf32>
      %169 = tpu.matmul %166, %168, %cst_79 {dimension_numbers = #tpu.dot_dimension_numbers<[1], [0], [0], [1], [0, 0, 1, 1], [], []>} : vector<8x16xbf16>, vector<16x16xbf16>, vector<8x16xf32> -> vector<8x16xf32>
      %170 = arith.addf %164, %169 : vector<8x16xf32>
      %171 = vector.extract_strided_slice %163 {offsets = [1, 0], sizes = [8, 16], strides = [1, 1]} : vector<12x32xf32> to vector<8x16xf32>
      %172 = arith.truncf %171 : vector<8x16xf32> to vector<8x16xbf16>
      %c0_80 = arith.constant 0 : index
      %c1 = arith.constant 1 : index
      %c0_81 = arith.constant 0 : index
      %c0_82 = arith.constant 0 : index
      %173 = vector.load %arg3[%c0_80, %c1, %c0_81, %c0_82] : memref<2x4x16x16xbf16, #tpu.memory_space<vmem>>, vector<1x1x16x16xbf16>
      %174 = vector.shape_cast %173 : vector<1x1x16x16xbf16> to vector<16x16xbf16>
      %cst_83 = arith.constant dense<0.000000e+00> : vector<8x16xf32>
      %175 = tpu.matmul %172, %174, %cst_83 {dimension_numbers = #tpu.dot_dimension_numbers<[1], [0], [0], [1], [0, 0, 1, 1], [], []>} : vector<8x16xbf16>, vector<16x16xbf16>, vector<8x16xf32> -> vector<8x16xf32>
      %176 = arith.addf %170, %175 : vector<8x16xf32>
      %177 = vector.extract_strided_slice %163 {offsets = [2, 0], sizes = [8, 16], strides = [1, 1]} : vector<12x32xf32> to vector<8x16xf32>
      %178 = arith.truncf %177 : vector<8x16xf32> to vector<8x16xbf16>
      %c0_84 = arith.constant 0 : index
      %c2 = arith.constant 2 : index
      %c0_85 = arith.constant 0 : index
      %c0_86 = arith.constant 0 : index
      %179 = vector.load %arg3[%c0_84, %c2, %c0_85, %c0_86] : memref<2x4x16x16xbf16, #tpu.memory_space<vmem>>, vector<1x1x16x16xbf16>
      %180 = vector.shape_cast %179 : vector<1x1x16x16xbf16> to vector<16x16xbf16>
      %cst_87 = arith.constant dense<0.000000e+00> : vector<8x16xf32>
      %181 = tpu.matmul %178, %180, %cst_87 {dimension_numbers = #tpu.dot_dimension_numbers<[1], [0], [0], [1], [0, 0, 1, 1], [], []>} : vector<8x16xbf16>, vector<16x16xbf16>, vector<8x16xf32> -> vector<8x16xf32>
      %182 = arith.addf %176, %181 : vector<8x16xf32>
      %183 = vector.extract_strided_slice %163 {offsets = [3, 0], sizes = [8, 16], strides = [1, 1]} : vector<12x32xf32> to vector<8x16xf32>
      %184 = arith.truncf %183 : vector<8x16xf32> to vector<8x16xbf16>
      %c0_88 = arith.constant 0 : index
      %c3 = arith.constant 3 : index
      %c0_89 = arith.constant 0 : index
      %c0_90 = arith.constant 0 : index
      %185 = vector.load %arg3[%c0_88, %c3, %c0_89, %c0_90] : memref<2x4x16x16xbf16, #tpu.memory_space<vmem>>, vector<1x1x16x16xbf16>
      %186 = vector.shape_cast %185 : vector<1x1x16x16xbf16> to vector<16x16xbf16>
      %cst_91 = arith.constant dense<0.000000e+00> : vector<8x16xf32>
      %187 = tpu.matmul %184, %186, %cst_91 {dimension_numbers = #tpu.dot_dimension_numbers<[1], [0], [0], [1], [0, 0, 1, 1], [], []>} : vector<8x16xbf16>, vector<16x16xbf16>, vector<8x16xf32> -> vector<8x16xf32>
      %188 = arith.addf %182, %187 : vector<8x16xf32>
      %cst_92 = arith.constant 0.000000e+00 : f32
      %189 = vector.broadcast %cst_92 : f32 to vector<8x16xf32>
      %190 = vector.extract_strided_slice %163 {offsets = [0, 16], sizes = [8, 16], strides = [1, 1]} : vector<12x32xf32> to vector<8x16xf32>
      %191 = arith.truncf %190 : vector<8x16xf32> to vector<8x16xbf16>
      %c1_93 = arith.constant 1 : index
      %c0_94 = arith.constant 0 : index
      %c0_95 = arith.constant 0 : index
      %c0_96 = arith.constant 0 : index
      %192 = vector.load %arg3[%c1_93, %c0_94, %c0_95, %c0_96] : memref<2x4x16x16xbf16, #tpu.memory_space<vmem>>, vector<1x1x16x16xbf16>
      %193 = vector.shape_cast %192 : vector<1x1x16x16xbf16> to vector<16x16xbf16>
      %cst_97 = arith.constant dense<0.000000e+00> : vector<8x16xf32>
      %194 = tpu.matmul %191, %193, %cst_97 {dimension_numbers = #tpu.dot_dimension_numbers<[1], [0], [0], [1], [0, 0, 1, 1], [], []>} : vector<8x16xbf16>, vector<16x16xbf16>, vector<8x16xf32> -> vector<8x16xf32>
      %195 = arith.addf %189, %194 : vector<8x16xf32>
      %196 = vector.extract_strided_slice %163 {offsets = [1, 16], sizes = [8, 16], strides = [1, 1]} : vector<12x32xf32> to vector<8x16xf32>
      %197 = arith.truncf %196 : vector<8x16xf32> to vector<8x16xbf16>
      %c1_98 = arith.constant 1 : index
      %c1_99 = arith.constant 1 : index
      %c0_100 = arith.constant 0 : index
      %c0_101 = arith.constant 0 : index
      %198 = vector.load %arg3[%c1_98, %c1_99, %c0_100, %c0_101] : memref<2x4x16x16xbf16, #tpu.memory_space<vmem>>, vector<1x1x16x16xbf16>
      %199 = vector.shape_cast %198 : vector<1x1x16x16xbf16> to vector<16x16xbf16>
      %cst_102 = arith.constant dense<0.000000e+00> : vector<8x16xf32>
      %200 = tpu.matmul %197, %199, %cst_102 {dimension_numbers = #tpu.dot_dimension_numbers<[1], [0], [0], [1], [0, 0, 1, 1], [], []>} : vector<8x16xbf16>, vector<16x16xbf16>, vector<8x16xf32> -> vector<8x16xf32>
      %201 = arith.addf %195, %200 : vector<8x16xf32>
      %202 = vector.extract_strided_slice %163 {offsets = [2, 16], sizes = [8, 16], strides = [1, 1]} : vector<12x32xf32> to vector<8x16xf32>
      %203 = arith.truncf %202 : vector<8x16xf32> to vector<8x16xbf16>
      %c1_103 = arith.constant 1 : index
      %c2_104 = arith.constant 2 : index
      %c0_105 = arith.constant 0 : index
      %c0_106 = arith.constant 0 : index
      %204 = vector.load %arg3[%c1_103, %c2_104, %c0_105, %c0_106] : memref<2x4x16x16xbf16, #tpu.memory_space<vmem>>, vector<1x1x16x16xbf16>
      %205 = vector.shape_cast %204 : vector<1x1x16x16xbf16> to vector<16x16xbf16>
      %cst_107 = arith.constant dense<0.000000e+00> : vector<8x16xf32>
      %206 = tpu.matmul %203, %205, %cst_107 {dimension_numbers = #tpu.dot_dimension_numbers<[1], [0], [0], [1], [0, 0, 1, 1], [], []>} : vector<8x16xbf16>, vector<16x16xbf16>, vector<8x16xf32> -> vector<8x16xf32>
      %207 = arith.addf %201, %206 : vector<8x16xf32>
      %208 = vector.extract_strided_slice %163 {offsets = [3, 16], sizes = [8, 16], strides = [1, 1]} : vector<12x32xf32> to vector<8x16xf32>
      %209 = arith.truncf %208 : vector<8x16xf32> to vector<8x16xbf16>
      %c1_108 = arith.constant 1 : index
      %c3_109 = arith.constant 3 : index
      %c0_110 = arith.constant 0 : index
      %c0_111 = arith.constant 0 : index
      %210 = vector.load %arg3[%c1_108, %c3_109, %c0_110, %c0_111] : memref<2x4x16x16xbf16, #tpu.memory_space<vmem>>, vector<1x1x16x16xbf16>
      %211 = vector.shape_cast %210 : vector<1x1x16x16xbf16> to vector<16x16xbf16>
      %cst_112 = arith.constant dense<0.000000e+00> : vector<8x16xf32>
      %212 = tpu.matmul %209, %211, %cst_112 {dimension_numbers = #tpu.dot_dimension_numbers<[1], [0], [0], [1], [0, 0, 1, 1], [], []>} : vector<8x16xbf16>, vector<16x16xbf16>, vector<8x16xf32> -> vector<8x16xf32>
      %213 = arith.addf %207, %212 : vector<8x16xf32>
      %214 = tpu.concatenate %188, %213 in 1 : vector<8x16xf32>, vector<8x16xf32> -> vector<8x32xf32>
      %c0_113 = arith.constant 0 : index
      %c0_114 = arith.constant 0 : index
      %215 = vector.load %arg4[%c0_113, %c0_114] : memref<1x32xf32, #tpu.memory_space<vmem>>, vector<1x32xf32>
      %216 = vector.broadcast %215 : vector<1x32xf32> to vector<8x32xf32>
      %217 = arith.addf %214, %216 : vector<8x32xf32>
      %cst_115 = arith.constant 5.000000e-01 : f32
      %218 = vector.broadcast %cst_115 : f32 to vector<8x32xf32>
      %219 = arith.mulf %218, %217 : vector<8x32xf32>
      %cst_116 = arith.constant 0.707106769 : f32
      %220 = vector.broadcast %cst_116 : f32 to vector<8x32xf32>
      %221 = arith.mulf %217, %220 : vector<8x32xf32>
      %222 = math.erf %221 : vector<8x32xf32>
      %cst_117 = arith.constant 1.000000e+00 : f32
      %223 = vector.broadcast %cst_117 : f32 to vector<8x32xf32>
      %224 = arith.addf %223, %222 : vector<8x32xf32>
      %225 = arith.mulf %219, %224 : vector<8x32xf32>
      %226 = vector.extract_strided_slice %163 {offsets = [2, 0], sizes = [8, 32], strides = [1, 1]} : vector<12x32xf32> to vector<8x32xf32>
      %227 = arith.addf %226, %225 : vector<8x32xf32>
      %c0_118 = arith.constant 0 : index
      %c0_119 = arith.constant 0 : index
      %228 = vector.load %arg5[%c0_118, %c0_119] : memref<1x32xf32, #tpu.memory_space<vmem>>, vector<1x32xf32>
      %c0_120 = arith.constant 0 : index
      %c0_121 = arith.constant 0 : index
      %229 = vector.load %arg6[%c0_120, %c0_121] : memref<1x32xf32, #tpu.memory_space<vmem>>, vector<1x32xf32>
      %cst_122 = arith.constant dense<0.000000e+00> : vector<8xf32>
      %230 = vector.multi_reduction <add>, %227, %cst_122 [1] : vector<8x32xf32> to vector<8xf32>
      %231 = vector.shape_cast %230 : vector<8xf32> to vector<8x1xf32>
      %cst_123 = arith.constant 3.200000e+01 : f32
      %232 = vector.broadcast %cst_123 : f32 to vector<8x1xf32>
      %233 = arith.divf %231, %232 : vector<8x1xf32>
      %234 = vector.broadcast %233 : vector<8x1xf32> to vector<8x32xf32>
      %235 = arith.subf %227, %234 : vector<8x32xf32>
      %236 = arith.mulf %235, %235 : vector<8x32xf32>
      %cst_124 = arith.constant dense<0.000000e+00> : vector<8xf32>
      %237 = vector.multi_reduction <add>, %236, %cst_124 [1] : vector<8x32xf32> to vector<8xf32>
      %238 = vector.shape_cast %237 : vector<8xf32> to vector<8x1xf32>
      %cst_125 = arith.constant 3.200000e+01 : f32
      %239 = vector.broadcast %cst_125 : f32 to vector<8x1xf32>
      %240 = arith.divf %238, %239 : vector<8x1xf32>
      %241 = vector.broadcast %233 : vector<8x1xf32> to vector<8x32xf32>
      %242 = arith.subf %227, %241 : vector<8x32xf32>
      %cst_126 = arith.constant 9.99999974E-6 : f32
      %243 = vector.broadcast %cst_126 : f32 to vector<8x1xf32>
      %244 = arith.addf %240, %243 : vector<8x1xf32>
      %245 = math.rsqrt %244 : vector<8x1xf32>
      %246 = vector.broadcast %245 : vector<8x1xf32> to vector<8x32xf32>
      %247 = arith.mulf %242, %246 : vector<8x32xf32>
      %248 = vector.broadcast %228 : vector<1x32xf32> to vector<8x32xf32>
      %249 = arith.mulf %247, %248 : vector<8x32xf32>
      %250 = vector.broadcast %229 : vector<1x32xf32> to vector<8x32xf32>
      %251 = arith.addf %249, %250 : vector<8x32xf32>
      %c0_127 = arith.constant 0 : index
      %c0_128 = arith.constant 0 : index
      %252 = vector.load %arg22[%c0_127, %c0_128] : memref<8x32xf32, #tpu.memory_space<vmem>>, vector<8x32xf32>
      tpu.vector_store %arg22[%c0_127, %c0_128], %251 {strides = array<i32>} : memref<8x32xf32, #tpu.memory_space<vmem>>, vector<8x32xf32>,
    } else {
    }
    %c0 = arith.constant 0 : index
    %c0_1 = arith.constant 0 : index
    %3 = vector.load %arg22[%c0, %c0_1] : memref<8x32xf32, #tpu.memory_space<vmem>>, vector<8x32xf32>
    %4 = arith.truncf %3 : vector<8x32xf32> to vector<8x32xbf16>
    %c0_2 = arith.constant 0 : index
    %c0_3 = arith.constant 0 : index
    %c0_4 = arith.constant 0 : index
    %5 = vector.load %arg7[%c0_2, %c0_3, %c0_4] : memref<1x32x128xbf16, #tpu.memory_space<vmem>>, vector<1x32x128xbf16>
    %6 = vector.shape_cast %5 : vector<1x32x128xbf16> to vector<32x128xbf16>
    %cst = arith.constant dense<0.000000e+00> : vector<8x128xf32>
    %7 = tpu.matmul %4, %6, %cst {dimension_numbers = #tpu.dot_dimension_numbers<[1], [0], [0], [1], [0, 0, 1, 1], [], []>} : vector<8x32xbf16>, vector<32x128xbf16>, vector<8x128xf32> -> vector<8x128xf32>
    %c0_5 = arith.constant 0 : index
    %c0_6 = arith.constant 0 : index
    %c0_7 = arith.constant 0 : index
    %8 = vector.load %arg8[%c0_5, %c0_6, %c0_7] : memref<1x1x128xf32, #tpu.memory_space<vmem>>, vector<1x1x128xf32>
    %9 = vector.shape_cast %8 : vector<1x1x128xf32> to vector<1x128xf32>
    %10 = vector.broadcast %9 : vector<1x128xf32> to vector<8x128xf32>
    %11 = arith.addf %7, %10 : vector<8x128xf32>
    %12 = vector.extract_strided_slice %11 {offsets = [0, 0], sizes = [8, 32], strides = [1, 1]} : vector<8x128xf32> to vector<8x32xf32>
    %13 = vector.extract_strided_slice %11 {offsets = [0, 32], sizes = [8, 32], strides = [1, 1]} : vector<8x128xf32> to vector<8x32xf32>
    %14 = vector.extract_strided_slice %11 {offsets = [0, 64], sizes = [8, 32], strides = [1, 1]} : vector<8x128xf32> to vector<8x32xf32>
    %15 = vector.extract_strided_slice %12 {offsets = [0, 0], sizes = [8, 8], strides = [1, 1]} : vector<8x32xf32> to vector<8x8xf32>
    %16 = vector.extract_strided_slice %12 {offsets = [0, 8], sizes = [8, 8], strides = [1, 1]} : vector<8x32xf32> to vector<8x8xf32>
    %17 = vector.extract_strided_slice %12 {offsets = [0, 16], sizes = [8, 8], strides = [1, 1]} : vector<8x32xf32> to vector<8x8xf32>
    %18 = vector.extract_strided_slice %12 {offsets = [0, 24], sizes = [8, 8], strides = [1, 1]} : vector<8x32xf32> to vector<8x8xf32>
    %19 = vector.shape_cast %15 : vector<8x8xf32> to vector<1x8x8xf32>
    %20 = vector.shape_cast %16 : vector<8x8xf32> to vector<1x8x8xf32>
    %21 = vector.shape_cast %17 : vector<8x8xf32> to vector<1x8x8xf32>
    %22 = vector.shape_cast %18 : vector<8x8xf32> to vector<1x8x8xf32>
    %23 = tpu.concatenate %19, %20, %21, %22 in 0 : vector<1x8x8xf32>, vector<1x8x8xf32>, vector<1x8x8xf32>, vector<1x8x8xf32> -> vector<4x8x8xf32>
    %24 = vector.extract_strided_slice %13 {offsets = [0, 0], sizes = [8, 8], strides = [1, 1]} : vector<8x32xf32> to vector<8x8xf32>
    %25 = vector.extract_strided_slice %13 {offsets = [0, 8], sizes = [8, 8], strides = [1, 1]} : vector<8x32xf32> to vector<8x8xf32>
    %26 = vector.extract_strided_slice %13 {offsets = [0, 16], sizes = [8, 8], strides = [1, 1]} : vector<8x32xf32> to vector<8x8xf32>
    %27 = vector.extract_strided_slice %13 {offsets = [0, 24], sizes = [8, 8], strides = [1, 1]} : vector<8x32xf32> to vector<8x8xf32>
    %28 = vector.shape_cast %24 : vector<8x8xf32> to vector<1x8x8xf32>
    %29 = vector.shape_cast %25 : vector<8x8xf32> to vector<1x8x8xf32>
    %30 = vector.shape_cast %26 : vector<8x8xf32> to vector<1x8x8xf32>
    %31 = vector.shape_cast %27 : vector<8x8xf32> to vector<1x8x8xf32>
    %32 = tpu.concatenate %28, %29, %30, %31 in 0 : vector<1x8x8xf32>, vector<1x8x8xf32>, vector<1x8x8xf32>, vector<1x8x8xf32> -> vector<4x8x8xf32>
    %33 = vector.extract_strided_slice %14 {offsets = [0, 0], sizes = [8, 8], strides = [1, 1]} : vector<8x32xf32> to vector<8x8xf32>
    %34 = vector.extract_strided_slice %14 {offsets = [0, 8], sizes = [8, 8], strides = [1, 1]} : vector<8x32xf32> to vector<8x8xf32>
    %35 = vector.extract_strided_slice %14 {offsets = [0, 16], sizes = [8, 8], strides = [1, 1]} : vector<8x32xf32> to vector<8x8xf32>
    %36 = vector.extract_strided_slice %14 {offsets = [0, 24], sizes = [8, 8], strides = [1, 1]} : vector<8x32xf32> to vector<8x8xf32>
    %37 = vector.shape_cast %33 : vector<8x8xf32> to vector<1x8x8xf32>
    %38 = vector.shape_cast %34 : vector<8x8xf32> to vector<1x8x8xf32>
    %39 = vector.shape_cast %35 : vector<8x8xf32> to vector<1x8x8xf32>
    %40 = vector.shape_cast %36 : vector<8x8xf32> to vector<1x8x8xf32>
    %41 = tpu.concatenate %37, %38, %39, %40 in 0 : vector<1x8x8xf32>, vector<1x8x8xf32>, vector<1x8x8xf32>, vector<1x8x8xf32> -> vector<4x8x8xf32>
    %42 = arith.truncf %23 : vector<4x8x8xf32> to vector<4x8x8xbf16>
    %43 = arith.truncf %32 : vector<4x8x8xf32> to vector<4x8x8xbf16>
    %44 = arith.truncf %41 : vector<4x8x8xf32> to vector<4x8x8xbf16>
    "tpu.trace_start"() <{level = 10 : i32, message = "htd,hsd->hts"}> : () -> ()
    %cst_8 = arith.constant dense<0.000000e+00> : vector<4x8x8xf32>
    %45 = tpu.matmul %42, %43, %cst_8 {dimension_numbers = #tpu.dot_dimension_numbers<[2], [2], [1], [1], [0, 0, 0, 1, 1, 1], [0], [0]>} : vector<4x8x8xbf16>, vector<4x8x8xbf16>, vector<4x8x8xf32> -> vector<4x8x8xf32>
    "tpu.trace_stop"() : () -> ()
    %cst_9 = arith.constant dense<0xFF800000> : vector<4x8xf32>
    %46 = vector.multi_reduction <maximumf>, %45, %cst_9 [2] : vector<4x8x8xf32> to vector<4x8xf32>
    %47 = vector.shape_cast %46 : vector<4x8xf32> to vector<4x8x1xf32>
    %48 = vector.broadcast %47 : vector<4x8x1xf32> to vector<4x8x8xf32>
    %49 = arith.subf %45, %48 : vector<4x8x8xf32>
    %50 = math.exp %49 : vector<4x8x8xf32>
    %cst_10 = arith.constant dense<0.000000e+00> : vector<4x8xf32>
    %51 = vector.multi_reduction <add>, %50, %cst_10 [2] : vector<4x8x8xf32> to vector<4x8xf32>
    %52 = vector.shape_cast %51 : vector<4x8xf32> to vector<4x8x1xf32>
    %53 = tpu.reciprocal %52 {approx = true} : vector<4x8x1xf32> -> vector<4x8x1xf32>
    %54 = vector.broadcast %53 : vector<4x8x1xf32> to vector<4x8x8xf32>
    %55 = arith.mulf %50, %54 : vector<4x8x8xf32>
    %cst_11 = arith.constant dense<0.000000e+00> : vector<8x8xf32>
    %56 = vector.multi_reduction <add>, %55, %cst_11 [0] : vector<4x8x8xf32> to vector<8x8xf32>
    %cst_12 = arith.constant 2.500000e-01 : f32
    %57 = vector.broadcast %cst_12 : f32 to vector<8x8xf32>
    %58 = arith.mulf %56, %57 : vector<8x8xf32>
    %59 = arith.truncf %58 : vector<8x8xf32> to vector<8x8xbf16>
    %c0_13 = arith.constant 0 : index
    %c0_14 = arith.constant 0 : index
    %c0_15 = arith.constant 0 : index
    %c0_16 = arith.constant 0 : index
    %60 = vector.load %arg21[%c0_13, %c0_14, %c0_15, %c0_16] : memref<1x1x8x8xbf16, #tpu.memory_space<vmem>>, vector<1x1x8x8xbf16>
    %61 = vector.shape_cast %60 : vector<1x1x8x8xbf16> to vector<8x8xbf16>
    %62 = vector.shape_cast %59 : vector<8x8xbf16> to vector<1x1x8x8xbf16>
    tpu.vector_store %arg21[%c0_13, %c0_14, %c0_15, %c0_16], %62 {strides = array<i32>} : memref<1x1x8x8xbf16, #tpu.memory_space<vmem>>, vector<1x1x8x8xbf16>,
    %63 = arith.truncf %55 : vector<4x8x8xf32> to vector<4x8x8xbf16>
    "tpu.trace_start"() <{level = 10 : i32, message = "hts,hsd->htd"}> : () -> ()
    %cst_17 = arith.constant dense<0.000000e+00> : vector<4x8x8xf32>
    %64 = tpu.matmul %63, %44, %cst_17 {dimension_numbers = #tpu.dot_dimension_numbers<[2], [1], [1], [2], [0, 0, 0, 1, 1, 2], [0], [0]>} : vector<4x8x8xbf16>, vector<4x8x8xbf16>, vector<4x8x8xf32> -> vector<4x8x8xf32>
    "tpu.trace_stop"() : () -> ()
    %65 = vector.extract_strided_slice %64 {offsets = [0, 0, 0], sizes = [1, 8, 8], strides = [1, 1, 1]} : vector<4x8x8xf32> to vector<1x8x8xf32>
    %66 = vector.shape_cast %65 : vector<1x8x8xf32> to vector<8x8xf32>
    %67 = vector.extract_strided_slice %64 {offsets = [1, 0, 0], sizes = [1, 8, 8], strides = [1, 1, 1]} : vector<4x8x8xf32> to vector<1x8x8xf32>
    %68 = vector.shape_cast %67 : vector<1x8x8xf32> to vector<8x8xf32>
    %69 = vector.extract_strided_slice %64 {offsets = [2, 0, 0], sizes = [1, 8, 8], strides = [1, 1, 1]} : vector<4x8x8xf32> to vector<1x8x8xf32>
    %70 = vector.shape_cast %69 : vector<1x8x8xf32> to vector<8x8xf32>
    %71 = vector.extract_strided_slice %64 {offsets = [3, 0, 0], sizes = [1, 8, 8], strides = [1, 1, 1]} : vector<4x8x8xf32> to vector<1x8x8xf32>
    %72 = vector.shape_cast %71 : vector<1x8x8xf32> to vector<8x8xf32>
    %73 = tpu.concatenate %66, %68, %70, %72 in 1 : vector<8x8xf32>, vector<8x8xf32>, vector<8x8xf32>, vector<8x8xf32> -> vector<8x32xf32>
    %74 = arith.truncf %73 : vector<8x32xf32> to vector<8x32xbf16>
    %c0_18 = arith.constant 0 : index
    %c0_19 = arith.constant 0 : index
    %c0_20 = arith.constant 0 : index
    %75 = vector.load %arg9[%c0_18, %c0_19, %c0_20] : memref<1x32x32xbf16, #tpu.memory_space<vmem>>, vector<1x32x32xbf16>
    %76 = vector.shape_cast %75 : vector<1x32x32xbf16> to vector<32x32xbf16>
    %cst_21 = arith.constant dense<0.000000e+00> : vector<8x32xf32>
    %77 = tpu.matmul %74, %76, %cst_21 {dimension_numbers = #tpu.dot_dimension_numbers<[1], [0], [0], [1], [0, 0, 1, 1], [], []>} : vector<8x32xbf16>, vector<32x32xbf16>, vector<8x32xf32> -> vector<8x32xf32>
    %c0_22 = arith.constant 0 : index
    %c0_23 = arith.constant 0 : index
    %c0_24 = arith.constant 0 : index
    %78 = vector.load %arg10[%c0_22, %c0_23, %c0_24] : memref<1x1x32xf32, #tpu.memory_space<vmem>>, vector<1x1x32xf32>
    %79 = vector.shape_cast %78 : vector<1x1x32xf32> to vector<1x32xf32>
    %80 = vector.broadcast %79 : vector<1x32xf32> to vector<8x32xf32>
    %81 = arith.addf %77, %80 : vector<8x32xf32>
    %82 = arith.addf %3, %81 : vector<8x32xf32>
    %c0_25 = arith.constant 0 : index
    %c0_26 = arith.constant 0 : index
    %c0_27 = arith.constant 0 : index
    %83 = vector.load %arg11[%c0_25, %c0_26, %c0_27] : memref<1x1x32xf32, #tpu.memory_space<vmem>>, vector<1x1x32xf32>
    %84 = vector.shape_cast %83 : vector<1x1x32xf32> to vector<1x32xf32>
    %c0_28 = arith.constant 0 : index
    %c0_29 = arith.constant 0 : index
    %c0_30 = arith.constant 0 : index
    %85 = vector.load %arg12[%c0_28, %c0_29, %c0_30] : memref<1x1x32xf32, #tpu.memory_space<vmem>>, vector<1x1x32xf32>
    %86 = vector.shape_cast %85 : vector<1x1x32xf32> to vector<1x32xf32>
    %cst_31 = arith.constant dense<0.000000e+00> : vector<8xf32>
    %87 = vector.multi_reduction <add>, %82, %cst_31 [1] : vector<8x32xf32> to vector<8xf32>
    %88 = vector.shape_cast %87 : vector<8xf32> to vector<8x1xf32>
    %cst_32 = arith.constant 3.200000e+01 : f32
    %89 = vector.broadcast %cst_32 : f32 to vector<8x1xf32>
    %90 = arith.divf %88, %89 : vector<8x1xf32>
    %91 = vector.broadcast %90 : vector<8x1xf32> to vector<8x32xf32>
    %92 = arith.subf %82, %91 : vector<8x32xf32>
    %93 = arith.mulf %92, %92 : vector<8x32xf32>
    %cst_33 = arith.constant dense<0.000000e+00> : vector<8xf32>
    %94 = vector.multi_reduction <add>, %93, %cst_33 [1] : vector<8x32xf32> to vector<8xf32>
    %95 = vector.shape_cast %94 : vector<8xf32> to vector<8x1xf32>
    %cst_34 = arith.constant 3.200000e+01 : f32
    %96 = vector.broadcast %cst_34 : f32 to vector<8x1xf32>
    %97 = arith.divf %95, %96 : vector<8x1xf32>
    %98 = vector.broadcast %90 : vector<8x1xf32> to vector<8x32xf32>
    %99 = arith.subf %82, %98 : vector<8x32xf32>
    %cst_35 = arith.constant 9.99999974E-6 : f32
    %100 = vector.broadcast %cst_35 : f32 to vector<8x1xf32>
    %101 = arith.addf %97, %100 : vector<8x1xf32>
    %102 = math.rsqrt %101 : vector<8x1xf32>
    %103 = vector.broadcast %102 : vector<8x1xf32> to vector<8x32xf32>
    %104 = arith.mulf %99, %103 : vector<8x32xf32>
    %105 = vector.broadcast %84 : vector<1x32xf32> to vector<8x32xf32>
    %106 = arith.mulf %104, %105 : vector<8x32xf32>
    %107 = vector.broadcast %86 : vector<1x32xf32> to vector<8x32xf32>
    %108 = arith.addf %106, %107 : vector<8x32xf32>
    %109 = arith.truncf %108 : vector<8x32xf32> to vector<8x32xbf16>
    %c0_36 = arith.constant 0 : index
    %c0_37 = arith.constant 0 : index
    %c0_38 = arith.constant 0 : index
    %110 = vector.load %arg13[%c0_36, %c0_37, %c0_38] : memref<1x32x128xbf16, #tpu.memory_space<vmem>>, vector<1x32x128xbf16>
    %111 = vector.shape_cast %110 : vector<1x32x128xbf16> to vector<32x128xbf16>
    %cst_39 = arith.constant dense<0.000000e+00> : vector<8x128xf32>
    %112 = tpu.matmul %109, %111, %cst_39 {dimension_numbers = #tpu.dot_dimension_numbers<[1], [0], [0], [1], [0, 0, 1, 1], [], []>} : vector<8x32xbf16>, vector<32x128xbf16>, vector<8x128xf32> -> vector<8x128xf32>
    %c0_40 = arith.constant 0 : index
    %c0_41 = arith.constant 0 : index
    %c0_42 = arith.constant 0 : index
    %113 = vector.load %arg14[%c0_40, %c0_41, %c0_42] : memref<1x1x128xf32, #tpu.memory_space<vmem>>, vector<1x1x128xf32>
    %114 = vector.shape_cast %113 : vector<1x1x128xf32> to vector<1x128xf32>
    %115 = vector.broadcast %114 : vector<1x128xf32> to vector<8x128xf32>
    %116 = arith.addf %112, %115 : vector<8x128xf32>
    %cst_43 = arith.constant 0.000000e+00 : f32
    %117 = vector.broadcast %cst_43 : f32 to vector<8x128xf32>
    %118 = arith.maximumf %116, %117 : vector<8x128xf32>
    %119 = arith.truncf %118 : vector<8x128xf32> to vector<8x128xbf16>
    %c0_44 = arith.constant 0 : index
    %c0_45 = arith.constant 0 : index
    %c0_46 = arith.constant 0 : index
    %120 = vector.load %arg15[%c0_44, %c0_45, %c0_46] : memref<1x128x32xbf16, #tpu.memory_space<vmem>>, vector<1x128x32xbf16>
    %121 = vector.shape_cast %120 : vector<1x128x32xbf16> to vector<128x32xbf16>
    %cst_47 = arith.constant dense<0.000000e+00> : vector<8x32xf32>
    %122 = tpu.matmul %119, %121, %cst_47 {dimension_numbers = #tpu.dot_dimension_numbers<[1], [0], [0], [1], [0, 0, 1, 1], [], []>} : vector<8x128xbf16>, vector<128x32xbf16>, vector<8x32xf32> -> vector<8x32xf32>
    %c0_48 = arith.constant 0 : index
    %c0_49 = arith.constant 0 : index
    %c0_50 = arith.constant 0 : index
    %123 = vector.load %arg16[%c0_48, %c0_49, %c0_50] : memref<1x1x32xf32, #tpu.memory_space<vmem>>, vector<1x1x32xf32>
    %124 = vector.shape_cast %123 : vector<1x1x32xf32> to vector<1x32xf32>
    %125 = vector.broadcast %124 : vector<1x32xf32> to vector<8x32xf32>
    %126 = arith.addf %122, %125 : vector<8x32xf32>
    %127 = arith.addf %108, %126 : vector<8x32xf32>
    %c0_51 = arith.constant 0 : index
    %c0_52 = arith.constant 0 : index
    %c0_53 = arith.constant 0 : index
    %128 = vector.load %arg17[%c0_51, %c0_52, %c0_53] : memref<1x1x32xf32, #tpu.memory_space<vmem>>, vector<1x1x32xf32>
    %129 = vector.shape_cast %128 : vector<1x1x32xf32> to vector<1x32xf32>
    %c0_54 = arith.constant 0 : index
    %c0_55 = arith.constant 0 : index
    %c0_56 = arith.constant 0 : index
    %130 = vector.load %arg18[%c0_54, %c0_55, %c0_56] : memref<1x1x32xf32, #tpu.memory_space<vmem>>, vector<1x1x32xf32>
    %131 = vector.shape_cast %130 : vector<1x1x32xf32> to vector<1x32xf32>
    %cst_57 = arith.constant dense<0.000000e+00> : vector<8xf32>
    %132 = vector.multi_reduction <add>, %127, %cst_57 [1] : vector<8x32xf32> to vector<8xf32>
    %133 = vector.shape_cast %132 : vector<8xf32> to vector<8x1xf32>
    %cst_58 = arith.constant 3.200000e+01 : f32
    %134 = vector.broadcast %cst_58 : f32 to vector<8x1xf32>
    %135 = arith.divf %133, %134 : vector<8x1xf32>
    %136 = vector.broadcast %135 : vector<8x1xf32> to vector<8x32xf32>
    %137 = arith.subf %127, %136 : vector<8x32xf32>
    %138 = arith.mulf %137, %137 : vector<8x32xf32>
    %cst_59 = arith.constant dense<0.000000e+00> : vector<8xf32>
    %139 = vector.multi_reduction <add>, %138, %cst_59 [1] : vector<8x32xf32> to vector<8xf32>
    %140 = vector.shape_cast %139 : vector<8xf32> to vector<8x1xf32>
    %cst_60 = arith.constant 3.200000e+01 : f32
    %141 = vector.broadcast %cst_60 : f32 to vector<8x1xf32>
    %142 = arith.divf %140, %141 : vector<8x1xf32>
    %143 = vector.broadcast %135 : vector<8x1xf32> to vector<8x32xf32>
    %144 = arith.subf %127, %143 : vector<8x32xf32>
    %cst_61 = arith.constant 9.99999974E-6 : f32
    %145 = vector.broadcast %cst_61 : f32 to vector<8x1xf32>
    %146 = arith.addf %142, %145 : vector<8x1xf32>
    %147 = math.rsqrt %146 : vector<8x1xf32>
    %148 = vector.broadcast %147 : vector<8x1xf32> to vector<8x32xf32>
    %149 = arith.mulf %144, %148 : vector<8x32xf32>
    %150 = vector.broadcast %129 : vector<1x32xf32> to vector<8x32xf32>
    %151 = arith.mulf %149, %150 : vector<8x32xf32>
    %152 = vector.broadcast %131 : vector<1x32xf32> to vector<8x32xf32>
    %153 = arith.addf %151, %152 : vector<8x32xf32>
    %c0_62 = arith.constant 0 : index
    %c0_63 = arith.constant 0 : index
    %154 = vector.load %arg22[%c0_62, %c0_63] : memref<8x32xf32, #tpu.memory_space<vmem>>, vector<8x32xf32>
    tpu.vector_store %arg22[%c0_62, %c0_63], %153 {strides = array<i32>} : memref<8x32xf32, #tpu.memory_space<vmem>>, vector<8x32xf32>,
    %155 = arith.truncf %153 : vector<8x32xf32> to vector<8x32xbf16>
    %c0_64 = arith.constant 0 : index
    %c0_65 = arith.constant 0 : index
    %c0_66 = arith.constant 0 : index
    %c0_67 = arith.constant 0 : index
    %156 = vector.load %arg20[%c0_64, %c0_65, %c0_66, %c0_67] : memref<1x1x8x32xbf16, #tpu.memory_space<vmem>>, vector<1x1x8x32xbf16>
    %157 = vector.shape_cast %156 : vector<1x1x8x32xbf16> to vector<8x32xbf16>
    %158 = vector.shape_cast %155 : vector<8x32xbf16> to vector<1x1x8x32xbf16>
    tpu.vector_store %arg20[%c0_64, %c0_65, %c0_66, %c0_67], %158 {strides = array<i32>} : memref<1x1x8x32xbf16, #tpu.memory_space<vmem>>, vector<1x1x8x32xbf16>,
    %c0_68 = arith.constant 0 : index
    %c0_69 = arith.constant 0 : index
    %c0_70 = arith.constant 0 : index
    %159 = vector.load %arg19[%c0_68, %c0_69, %c0_70] : memref<1x8x32xf32, #tpu.memory_space<vmem>>, vector<1x8x32xf32>
    %160 = vector.shape_cast %159 : vector<1x8x32xf32> to vector<8x32xf32>
    %161 = vector.shape_cast %153 : vector<8x32xf32> to vector<1x8x32xf32>
    tpu.vector_store %arg19[%c0_68, %c0_69, %c0_70], %161 {strides = array<i32>} : memref<1x8x32xf32, #tpu.memory_space<vmem>>, vector<1x8x32xf32>,
    return
  }
  func.func @transform_0(%arg0: i32, %arg1: i32) -> (i32, i32, i32) {
    %c0_i32 = arith.constant 0 : i32
    %c0_i32_0 = arith.constant 0 : i32
    %c0_i32_1 = arith.constant 0 : i32
    return %arg0, %c0_i32, %c0_i32_0 : i32, i32, i32
  }
  func.func @transform_1(%arg0: i32, %arg1: i32) -> (i32, i32, i32, i32) {
    %c0_i32 = arith.constant 0 : i32
    %c0_i32_0 = arith.constant 0 : i32
    %c0_i32_1 = arith.constant 0 : i32
    %c0_i32_2 = arith.constant 0 : i32
    %c0_i32_3 = arith.constant 0 : i32
    return %c0_i32, %c0_i32_0, %c0_i32_1, %c0_i32_2 : i32, i32, i32, i32
  }
  func.func @transform_2(%arg0: i32, %arg1: i32) -> (i32, i32) {
    %c0_i32 = arith.constant 0 : i32
    %c0_i32_0 = arith.constant 0 : i32
    %c0_i32_1 = arith.constant 0 : i32
    return %c0_i32, %c0_i32_0 : i32, i32
  }
  func.func @transform_3(%arg0: i32, %arg1: i32) -> (i32, i32) {
    %c0_i32 = arith.constant 0 : i32
    %c0_i32_0 = arith.constant 0 : i32
    %c0_i32_1 = arith.constant 0 : i32
    return %c0_i32, %c0_i32_0 : i32, i32
  }
  func.func @transform_4(%arg0: i32, %arg1: i32) -> (i32, i32) {
    %c0_i32 = arith.constant 0 : i32
    %c0_i32_0 = arith.constant 0 : i32
    %c0_i32_1 = arith.constant 0 : i32
    return %c0_i32, %c0_i32_0 : i32, i32
  }
  func.func @transform_5(%arg0: i32, %arg1: i32) -> (i32, i32, i32) {
    %c0_i32 = arith.constant 0 : i32
    %c0_i32_0 = arith.constant 0 : i32
    %c0_i32_1 = arith.constant 0 : i32
    return %arg1, %c0_i32, %c0_i32_0 : i32, i32, i32
  }
  func.func @transform_6(%arg0: i32, %arg1: i32) -> (i32, i32, i32) {
    %c0_i32 = arith.constant 0 : i32
    %c0_i32_0 = arith.constant 0 : i32
    %c0_i32_1 = arith.constant 0 : i32
    return %arg1, %c0_i32, %c0_i32_0 : i32, i32, i32
  }
  func.func @transform_7(%arg0: i32, %arg1: i32) -> (i32, i32, i32) {
    %c0_i32 = arith.constant 0 : i32
    %c0_i32_0 = arith.constant 0 : i32
    %c0_i32_1 = arith.constant 0 : i32
    return %arg1, %c0_i32, %c0_i32_0 : i32, i32, i32
  }
  func.func @transform_8(%arg0: i32, %arg1: i32) -> (i32, i32, i32) {
    %c0_i32 = arith.constant 0 : i32
    %c0_i32_0 = arith.constant 0 : i32
    %c0_i32_1 = arith.constant 0 : i32
    return %arg1, %c0_i32, %c0_i32_0 : i32, i32, i32
  }
  func.func @transform_9(%arg0: i32, %arg1: i32) -> (i32, i32, i32) {
    %c0_i32 = arith.constant 0 : i32
    %c0_i32_0 = arith.constant 0 : i32
    %c0_i32_1 = arith.constant 0 : i32
    return %arg1, %c0_i32, %c0_i32_0 : i32, i32, i32
  }
  func.func @transform_10(%arg0: i32, %arg1: i32) -> (i32, i32, i32) {
    %c0_i32 = arith.constant 0 : i32
    %c0_i32_0 = arith.constant 0 : i32
    %c0_i32_1 = arith.constant 0 : i32
    return %arg1, %c0_i32, %c0_i32_0 : i32, i32, i32
  }
  func.func @transform_11(%arg0: i32, %arg1: i32) -> (i32, i32, i32) {
    %c0_i32 = arith.constant 0 : i32
    %c0_i32_0 = arith.constant 0 : i32
    %c0_i32_1 = arith.constant 0 : i32
    return %arg1, %c0_i32, %c0_i32_0 : i32, i32, i32
  }
  func.func @transform_12(%arg0: i32, %arg1: i32) -> (i32, i32, i32) {
    %c0_i32 = arith.constant 0 : i32
    %c0_i32_0 = arith.constant 0 : i32
    %c0_i32_1 = arith.constant 0 : i32
    return %arg1, %c0_i32, %c0_i32_0 : i32, i32, i32
  }
  func.func @transform_13(%arg0: i32, %arg1: i32) -> (i32, i32, i32) {
    %c0_i32 = arith.constant 0 : i32
    %c0_i32_0 = arith.constant 0 : i32
    %c0_i32_1 = arith.constant 0 : i32
    return %arg1, %c0_i32, %c0_i32_0 : i32, i32, i32
  }
  func.func @transform_14(%arg0: i32, %arg1: i32) -> (i32, i32, i32) {
    %c0_i32 = arith.constant 0 : i32
    %c0_i32_0 = arith.constant 0 : i32
    %c0_i32_1 = arith.constant 0 : i32
    return %arg1, %c0_i32, %c0_i32_0 : i32, i32, i32
  }
  func.func @transform_15(%arg0: i32, %arg1: i32) -> (i32, i32, i32) {
    %c0_i32 = arith.constant 0 : i32
    %c0_i32_0 = arith.constant 0 : i32
    %c0_i32_1 = arith.constant 0 : i32
    return %arg1, %c0_i32, %c0_i32_0 : i32, i32, i32
  }
  func.func @transform_16(%arg0: i32, %arg1: i32) -> (i32, i32, i32) {
    %c0_i32 = arith.constant 0 : i32
    %c0_i32_0 = arith.constant 0 : i32
    %c0_i32_1 = arith.constant 0 : i32
    return %arg1, %c0_i32, %c0_i32_0 : i32, i32, i32
  }
  func.func @transform_17(%arg0: i32, %arg1: i32) -> (i32, i32, i32) {
    %c0_i32 = arith.constant 0 : i32
    %c0_i32_0 = arith.constant 0 : i32
    %c0_i32_1 = arith.constant 0 : i32
    return %arg0, %c0_i32, %c0_i32_0 : i32, i32, i32
  }
  func.func @transform_18(%arg0: i32, %arg1: i32) -> (i32, i32, i32, i32) {
    %c0_i32 = arith.constant 0 : i32
    %c0_i32_0 = arith.constant 0 : i32
    %c0_i32_1 = arith.constant 0 : i32
    return %arg0, %arg1, %c0_i32, %c0_i32_0 : i32, i32, i32, i32
  }
  func.func @transform_19(%arg0: i32, %arg1: i32) -> (i32, i32, i32, i32) {
    %c0_i32 = arith.constant 0 : i32
    %c0_i32_0 = arith.constant 0 : i32
    %c0_i32_1 = arith.constant 0 : i32
    return %arg0, %arg1, %c0_i32, %c0_i32_0 : i32, i32, i32, i32
  }
}

</mosaic_0001>

<llo_original>
// kernel: tpu_custom_call.1
$region0: #{tpu_custom_call.1}
  #allocation0 [shape = 'u32[]', space=smem, size = 0x4, offset = 0x4, fixed_abs, tag = 'smem constant byte address 0x4 - core index']
  #allocation1 [shape = 'u32[144,128]{1,0:T(1,128)}', space=vmem, size = 0x12000, scoped, tag = 'internal scratch']
  #allocation2 [shape = 'f32[8,32]{1,0:T(8,128)}', space=vmem, size = 0x1000, scoped, tag = 'scratch operand']
  %s0 = inlined_call_operand.vmem [shape: f32[2,12,32], index: 0, kind: input, shape index: {}]
  %s1 = inlined_call_operand.vmem [shape: bf16[2,4,16,16], index: 1, kind: input, shape index: {}]
  %s2 = inlined_call_operand.vmem [shape: f32[1,32], index: 2, kind: input, shape index: {}]
  %s3 = inlined_call_operand.vmem [shape: f32[1,32], index: 3, kind: input, shape index: {}]
  %s4 = inlined_call_operand.vmem [shape: f32[1,32], index: 4, kind: input, shape index: {}]
  %s5 = inlined_call_operand.vmem [shape: bf16[2,32,128], index: 5, kind: input, shape index: {}]
  %s6 = inlined_call_operand.vmem [shape: f32[2,1,128], index: 6, kind: input, shape index: {}]
  %s7 = inlined_call_operand.vmem [shape: bf16[2,32,32], index: 7, kind: input, shape index: {}]
  %s8 = inlined_call_operand.vmem [shape: f32[2,1,32], index: 8, kind: input, shape index: {}]
  %s9 = inlined_call_operand.vmem [shape: f32[2,1,32], index: 9, kind: input, shape index: {}]
  %s10 = inlined_call_operand.vmem [shape: f32[2,1,32], index: 10, kind: input, shape index: {}]
  %s11 = inlined_call_operand.vmem [shape: bf16[2,32,128], index: 11, kind: input, shape index: {}]
  %s12 = inlined_call_operand.vmem [shape: f32[2,1,128], index: 12, kind: input, shape index: {}]
  %s13 = inlined_call_operand.vmem [shape: bf16[2,128,32], index: 13, kind: input, shape index: {}]
  %s14 = inlined_call_operand.vmem [shape: f32[2,1,32], index: 14, kind: input, shape index: {}]
  %s15 = inlined_call_operand.vmem [shape: f32[2,1,32], index: 15, kind: input, shape index: {}]
  %s16 = inlined_call_operand.vmem [shape: f32[2,1,32], index: 16, kind: input, shape index: {}]
  %s17 = inlined_call_operand.hbm [shape: f32[2,8,32], index: 17, kind: output, shape index: {0}]
  %s18 = inlined_call_operand.hbm [shape: bf16[2,2,8,32], index: 18, kind: output, shape index: {1}]
  %s19 = inlined_call_operand.hbm [shape: bf16[2,2,8,8], index: 19, kind: output, shape index: {2}]
  %20 = xla_tuple %s17, %s18, %s19
  %s21 = sld [smem:[#allocation0]]
  $region121: #{tpu_custom_call.1} parent=0
    _
  %s23 = ssub.s32 1, %s21
  %s24 = scalar_select 0, %s23, %s21
  $region1: #{tpu_custom_call.1} parent=0
    #allocation3 [shape = 'u8[8192]{0}', space=vmem, size = 0x2000, scoped, tag = 'output window, operand 0']
    #allocation4 [shape = 's32[2]{0}', space=sflag, size = 0x8, scoped, tag = 'scoped memory for tpu_custom_call.1']
    #allocation5 [shape = 'u8[4096]{0}', space=vmem, size = 0x1000, scoped, tag = 'output window, operand 1']
    #allocation6 [shape = 's32[2]{0}', space=sflag, size = 0x8, scoped, tag = 'scoped memory for tpu_custom_call.1']
    #allocation7 [shape = 'u8[4096]{0}', space=vmem, size = 0x1000, scoped, tag = 'output window, operand 2']
    %25 = vsyncpa [#allocation4], 0
    %s26 = scalar_lea.sflag [#allocation4], 1
    %27 = vsyncpa %s26, 0
    %28 = vsyncpa [#allocation6], 0
    %s29 = scalar_lea.sflag [#allocation6], 1
    %30 = vsyncpa %s29, 0
    loop: start=0, step=1, limit=6
    $region2: #{tpu_custom_call.1} parent=1 // loop_pre_header
      _
    $region3: #{tpu_custom_call.1} parent=1 // loop_header
      %s32 = sphi 0, %s36
      %p33 = scmp.ge.s32.totalorder %s32, 6
      %s39 = sphi 0, %s51
      %s40 = sphi 0, %s47
      %s41 = sphi 0, %s39
      %s42 = sphi 0, %s40
      %s43 = sphi 0, %s41
      %s44 = sphi 0, %s42
      %s54 = sphi 0, %s56
      %s57 = sphi 0, %s54
      %s58 = sphi 0, %s57
      %s74 = sphi 0, %s58
      %s78 = sphi 0, %s78
      %s80 = sphi 0, %s78
      %s81 = sphi 0, %s80
      %s95 = sphi 0, %s81
      %s99 = sphi 0, %s99
      %s101 = sphi 0, %s99
      %s102 = sphi 0, %s101
      %s116 = sphi 0, %s102
      %s120 = sphi 0, %s120
      %s122 = sphi 0, %s120
      %s123 = sphi 0, %s122
      %s137 = sphi 0, %s123
      %s141 = sphi 0, %s141
      %s143 = sphi 0, %s141
      %s144 = sphi 0, %s143
      %s158 = sphi 0, %s144
      %s164 = sphi 0, %s166
      %s167 = sphi 0, %s164
      %s168 = sphi 0, %s167
      %s184 = sphi 0, %s168
      %s190 = sphi 0, %s192
      %s193 = sphi 0, %s190
      %s194 = sphi 0, %s193
      %s210 = sphi 0, %s194
      %s216 = sphi 0, %s218
      %s219 = sphi 0, %s216
      %s220 = sphi 0, %s219
      %s236 = sphi 0, %s220
      %s242 = sphi 0, %s244
      %s245 = sphi 0, %s242
      %s246 = sphi 0, %s245
      %s262 = sphi 0, %s246
      %s268 = sphi 0, %s270
      %s271 = sphi 0, %s268
      %s272 = sphi 0, %s271
      %s288 = sphi 0, %s272
      %s294 = sphi 0, %s296
      %s297 = sphi 0, %s294
      %s298 = sphi 0, %s297
      %s314 = sphi 0, %s298
      %s320 = sphi 0, %s322
      %s323 = sphi 0, %s320
      %s324 = sphi 0, %s323
      %s340 = sphi 0, %s324
      %s346 = sphi 0, %s348
      %s349 = sphi 0, %s346
      %s350 = sphi 0, %s349
      %s366 = sphi 0, %s350
      %s372 = sphi 0, %s374
      %s375 = sphi 0, %s372
      %s376 = sphi 0, %s375
      %s392 = sphi 0, %s376
      %s398 = sphi 0, %s400
      %s401 = sphi 0, %s398
      %s402 = sphi 0, %s401
      %s418 = sphi 0, %s402
      %s424 = sphi 0, %s426
      %s427 = sphi 0, %s424
      %s428 = sphi 0, %s427
      %s444 = sphi 0, %s428
      %s450 = sphi 0, %s452
      %s453 = sphi 0, %s450
      %s454 = sphi 0, %s453
      %s470 = sphi 0, %s454
      %s476 = sphi 0, %s478
      %s479 = sphi 0, %s476
      %s480 = sphi 0, %s479
      %s496 = sphi 0, %s480
      %s504 = sphi 0, %s506
      %s507 = sphi 0, %s504
      %s508 = sphi 0, %s507
      %s524 = sphi 0, %s508
      %s532 = sphi 0, %s534
      %s535 = sphi 0, %s532
      %s536 = sphi 0, %s535
      %s552 = sphi 0, %s536
    $region4: #{tpu_custom_call.1} parent=1 // loop_header_branch
      %35 = sbr.rel (%p33) target = $region8
    $region5: #{tpu_custom_call.1} parent=1 // loop_body
      %s37 = ssub.s32 %s32, 1
      %s38 = ssub.s32 %s32, 2
      %s45 = sadd.s32 1, %s40
      %p46 = scmp.ge.s32.totalorder %s45, 2
      %s47 = scalar_select %p46, 0, %s45
      %s48 = sadd.s32 1, %s39
      %s49 = scalar_select %p46, %s48, %s39
      %p50 = scmp.ge.s32.totalorder %s49, 2
      %s51 = scalar_select %p50, 0, %s49
      %s52 = ssub.s32 %s39, %s51
      %p53 = scmp.eq.s32.totalorder %s52, 0
      %s55 = sadd.s32 %s54, 1
      %s56 = scalar_select %p53, %s54, %s55
      %p59 = pneg %p53
      %p60 = scmp.eq.s32.totalorder %s32, 3
      %p61 = por %p59, %p60
      %p62 = scmp.ne.s32.totalorder %s54, %s57
      %p63 = scmp.eq.s32.totalorder %s32, 0
      %p64 = por %p62, %p63
      %p65 = scmp.ne.s32.totalorder %s54, %s57
      %p66 = scmp.eq.s32.totalorder %s37, 3
      %p67 = por %p65, %p66
      %p68 = scmp.ne.s32.totalorder %s57, %s58
      %p69 = scmp.eq.s32.totalorder %s37, 0
      %p70 = por %p68, %p69
      %p71 = scmp.ne.s32.totalorder %s57, %s58
      %p72 = scmp.eq.s32.totalorder %s38, 3
      %p73 = por %p71, %p72
      %p75 = scmp.ne.s32.totalorder %s58, %s74
      %p76 = scmp.eq.s32.totalorder %s38, 0
      %p77 = por %p75, %p76
      %s79 = sadd.s32 %s78, 1
      %p82 = scmp.eq.s32.totalorder %s32, 3
      %p83 = scmp.ne.s32.totalorder %s78, %s80
      %p84 = scmp.eq.s32.totalorder %s32, 0
      %p85 = por %p83, %p84
      %p86 = scmp.ne.s32.totalorder %s78, %s80
      %p87 = scmp.eq.s32.totalorder %s37, 3
      %p88 = por %p86, %p87
      %p89 = scmp.ne.s32.totalorder %s80, %s81
      %p90 = scmp.eq.s32.totalorder %s37, 0
      %p91 = por %p89, %p90
      %p92 = scmp.ne.s32.totalorder %s80, %s81
      %p93 = scmp.eq.s32.totalorder %s38, 3
      %p94 = por %p92, %p93
      %p96 = scmp.ne.s32.totalorder %s81, %s95
      %p97 = scmp.eq.s32.totalorder %s38, 0
      %p98 = por %p96, %p97
      %s100 = sadd.s32 %s99, 1
      %p103 = scmp.eq.s32.totalorder %s32, 3
      %p104 = scmp.ne.s32.totalorder %s99, %s101
      %p105 = scmp.eq.s32.totalorder %s32, 0
      %p106 = por %p104, %p105
      %p107 = scmp.ne.s32.totalorder %s99, %s101
      %p108 = scmp.eq.s32.totalorder %s37, 3
      %p109 = por %p107, %p108
      %p110 = scmp.ne.s32.totalorder %s101, %s102
      %p111 = scmp.eq.s32.totalorder %s37, 0
      %p112 = por %p110, %p111
      %p113 = scmp.ne.s32.totalorder %s101, %s102
      %p114 = scmp.eq.s32.totalorder %s38, 3
      %p115 = por %p113, %p114
      %p117 = scmp.ne.s32.totalorder %s102, %s116
      %p118 = scmp.eq.s32.totalorder %s38, 0
      %p119 = por %p117, %p118
      %s121 = sadd.s32 %s120, 1
      %p124 = scmp.eq.s32.totalorder %s32, 3
      %p125 = scmp.ne.s32.totalorder %s120, %s122
      %p126 = scmp.eq.s32.totalorder %s32, 0
      %p127 = por %p125, %p126
      %p128 = scmp.ne.s32.totalorder %s120, %s122
      %p129 = scmp.eq.s32.totalorder %s37, 3
      %p130 = por %p128, %p129
      %p131 = scmp.ne.s32.totalorder %s122, %s123
      %p132 = scmp.eq.s32.totalorder %s37, 0
      %p133 = por %p131, %p132
      %p134 = scmp.ne.s32.totalorder %s122, %s123
      %p135 = scmp.eq.s32.totalorder %s38, 3
      %p136 = por %p134, %p135
      %p138 = scmp.ne.s32.totalorder %s123, %s137
      %p139 = scmp.eq.s32.totalorder %s38, 0
      %p140 = por %p138, %p139
      %s142 = sadd.s32 %s141, 1
      %p145 = scmp.eq.s32.totalorder %s32, 3
      %p146 = scmp.ne.s32.totalorder %s141, %s143
      %p147 = scmp.eq.s32.totalorder %s32, 0
      %p148 = por %p146, %p147
      %p149 = scmp.ne.s32.totalorder %s141, %s143
      %p150 = scmp.eq.s32.totalorder %s37, 3
      %p151 = por %p149, %p150
      %p152 = scmp.ne.s32.totalorder %s143, %s144
      %p153 = scmp.eq.s32.totalorder %s37, 0
      %p154 = por %p152, %p153
      %p155 = scmp.ne.s32.totalorder %s143, %s144
      %p156 = scmp.eq.s32.totalorder %s38, 3
      %p157 = por %p155, %p156
      %p159 = scmp.ne.s32.totalorder %s144, %s158
      %p160 = scmp.eq.s32.totalorder %s38, 0
      %p161 = por %p159, %p160
      %s162 = ssub.s32 %s40, %s47
      %p163 = scmp.eq.s32.totalorder %s162, 0
      %s165 = sadd.s32 %s164, 1
      %s166 = scalar_select %p163, %s164, %s165
      %p169 = pneg %p163
      %p170 = scmp.eq.s32.totalorder %s32, 3
      %p171 = por %p169, %p170
      %p172 = scmp.ne.s32.totalorder %s164, %s167
      %p173 = scmp.eq.s32.totalorder %s32, 0
      %p174 = por %p172, %p173
      %p175 = scmp.ne.s32.totalorder %s164, %s167
      %p176 = scmp.eq.s32.totalorder %s37, 3
      %p177 = por %p175, %p176
      %p178 = scmp.ne.s32.totalorder %s167, %s168
      %p179 = scmp.eq.s32.totalorder %s37, 0
      %p180 = por %p178, %p179
      %p181 = scmp.ne.s32.totalorder %s167, %s168
      %p182 = scmp.eq.s32.totalorder %s38, 3
      %p183 = por %p181, %p182
      %p185 = scmp.ne.s32.totalorder %s168, %s184
      %p186 = scmp.eq.s32.totalorder %s38, 0
      %p187 = por %p185, %p186
      %s188 = ssub.s32 %s40, %s47
      %p189 = scmp.eq.s32.totalorder %s188, 0
      %s191 = sadd.s32 %s190, 1
      %s192 = scalar_select %p189, %s190, %s191
      %p195 = pneg %p189
      %p196 = scmp.eq.s32.totalorder %s32, 3
      %p197 = por %p195, %p196
      %p198 = scmp.ne.s32.totalorder %s190, %s193
      %p199 = scmp.eq.s32.totalorder %s32, 0
      %p200 = por %p198, %p199
      %p201 = scmp.ne.s32.totalorder %s190, %s193
      %p202 = scmp.eq.s32.totalorder %s37, 3
      %p203 = por %p201, %p202
      %p204 = scmp.ne.s32.totalorder %s193, %s194
      %p205 = scmp.eq.s32.totalorder %s37, 0
      %p206 = por %p204, %p205
      %p207 = scmp.ne.s32.totalorder %s193, %s194
      %p208 = scmp.eq.s32.totalorder %s38, 3
      %p209 = por %p207, %p208
      %p211 = scmp.ne.s32.totalorder %s194, %s210
      %p212 = scmp.eq.s32.totalorder %s38, 0
      %p213 = por %p211, %p212
      %s214 = ssub.s32 %s40, %s47
      %p215 = scmp.eq.s32.totalorder %s214, 0
      %s217 = sadd.s32 %s216, 1
      %s218 = scalar_select %p215, %s216, %s217
      %p221 = pneg %p215
      %p222 = scmp.eq.s32.totalorder %s32, 3
      %p223 = por %p221, %p222
      %p224 = scmp.ne.s32.totalorder %s216, %s219
      %p225 = scmp.eq.s32.totalorder %s32, 0
      %p226 = por %p224, %p225
      %p227 = scmp.ne.s32.totalorder %s216, %s219
      %p228 = scmp.eq.s32.totalorder %s37, 3
      %p229 = por %p227, %p228
      %p230 = scmp.ne.s32.totalorder %s219, %s220
      %p231 = scmp.eq.s32.totalorder %s37, 0
      %p232 = por %p230, %p231
      %p233 = scmp.ne.s32.totalorder %s219, %s220
      %p234 = scmp.eq.s32.totalorder %s38, 3
      %p235 = por %p233, %p234
      %p237 = scmp.ne.s32.totalorder %s220, %s236
      %p238 = scmp.eq.s32.totalorder %s38, 0
      %p239 = por %p237, %p238
      %s240 = ssub.s32 %s40, %s47
      %p241 = scmp.eq.s32.totalorder %s240, 0
      %s243 = sadd.s32 %s242, 1
      %s244 = scalar_select %p241, %s242, %s243
      %p247 = pneg %p241
      %p248 = scmp.eq.s32.totalorder %s32, 3
      %p249 = por %p247, %p248
      %p250 = scmp.ne.s32.totalorder %s242, %s245
      %p251 = scmp.eq.s32.totalorder %s32, 0
      %p252 = por %p250, %p251
      %p253 = scmp.ne.s32.totalorder %s242, %s245
      %p254 = scmp.eq.s32.totalorder %s37, 3
      %p255 = por %p253, %p254
      %p256 = scmp.ne.s32.totalorder %s245, %s246
      %p257 = scmp.eq.s32.totalorder %s37, 0
      %p258 = por %p256, %p257
      %p259 = scmp.ne.s32.totalorder %s245, %s246
      %p260 = scmp.eq.s32.totalorder %s38, 3
      %p261 = por %p259, %p260
      %p263 = scmp.ne.s32.totalorder %s246, %s262
      %p264 = scmp.eq.s32.totalorder %s38, 0
      %p265 = por %p263, %p264
      %s266 = ssub.s32 %s40, %s47
      %p267 = scmp.eq.s32.totalorder %s266, 0
      %s269 = sadd.s32 %s268, 1
      %s270 = scalar_select %p267, %s268, %s269
      %p273 = pneg %p267
      %p274 = scmp.eq.s32.totalorder %s32, 3
      %p275 = por %p273, %p274
      %p276 = scmp.ne.s32.totalorder %s268, %s271
      %p277 = scmp.eq.s32.totalorder %s32, 0
      %p278 = por %p276, %p277
      %p279 = scmp.ne.s32.totalorder %s268, %s271
      %p280 = scmp.eq.s32.totalorder %s37, 3
      %p281 = por %p279, %p280
      %p282 = scmp.ne.s32.totalorder %s271, %s272
      %p283 = scmp.eq.s32.totalorder %s37, 0
      %p284 = por %p282, %p283
      %p285 = scmp.ne.s32.totalorder %s271, %s272
      %p286 = scmp.eq.s32.totalorder %s38, 3
      %p287 = por %p285, %p286
      %p289 = scmp.ne.s32.totalorder %s272, %s288
      %p290 = scmp.eq.s32.totalorder %s38, 0
      %p291 = por %p289, %p290
      %s292 = ssub.s32 %s40, %s47
      %p293 = scmp.eq.s32.totalorder %s292, 0
      %s295 = sadd.s32 %s294, 1
      %s296 = scalar_select %p293, %s294, %s295
      %p299 = pneg %p293
      %p300 = scmp.eq.s32.totalorder %s32, 3
      %p301 = por %p299, %p300
      %p302 = scmp.ne.s32.totalorder %s294, %s297
      %p303 = scmp.eq.s32.totalorder %s32, 0
      %p304 = por %p302, %p303
      %p305 = scmp.ne.s32.totalorder %s294, %s297
      %p306 = scmp.eq.s32.totalorder %s37, 3
      %p307 = por %p305, %p306
      %p308 = scmp.ne.s32.totalorder %s297, %s298
      %p309 = scmp.eq.s32.totalorder %s37, 0
      %p310 = por %p308, %p309
      %p311 = scmp.ne.s32.totalorder %s297, %s298
      %p312 = scmp.eq.s32.totalorder %s38, 3
      %p313 = por %p311, %p312
      %p315 = scmp.ne.s32.totalorder %s298, %s314
      %p316 = scmp.eq.s32.totalorder %s38, 0
      %p317 = por %p315, %p316
      %s318 = ssub.s32 %s40, %s47
      %p319 = scmp.eq.s32.totalorder %s318, 0
      %s321 = sadd.s32 %s320, 1
      %s322 = scalar_select %p319, %s320, %s321
      %p325 = pneg %p319
      %p326 = scmp.eq.s32.totalorder %s32, 3
      %p327 = por %p325, %p326
      %p328 = scmp.ne.s32.totalorder %s320, %s323
      %p329 = scmp.eq.s32.totalorder %s32, 0
      %p330 = por %p328, %p329
      %p331 = scmp.ne.s32.totalorder %s320, %s323
      %p332 = scmp.eq.s32.totalorder %s37, 3
      %p333 = por %p331, %p332
      %p334 = scmp.ne.s32.totalorder %s323, %s324
      %p335 = scmp.eq.s32.totalorder %s37, 0
      %p336 = por %p334, %p335
      %p337 = scmp.ne.s32.totalorder %s323, %s324
      %p338 = scmp.eq.s32.totalorder %s38, 3
      %p339 = por %p337, %p338
      %p341 = scmp.ne.s32.totalorder %s324, %s340
      %p342 = scmp.eq.s32.totalorder %s38, 0
      %p343 = por %p341, %p342
      %s344 = ssub.s32 %s40, %s47
      %p345 = scmp.eq.s32.totalorder %s344, 0
      %s347 = sadd.s32 %s346, 1
      %s348 = scalar_select %p345, %s346, %s347
      %p351 = pneg %p345
      %p352 = scmp.eq.s32.totalorder %s32, 3
      %p353 = por %p351, %p352
      %p354 = scmp.ne.s32.totalorder %s346, %s349
      %p355 = scmp.eq.s32.totalorder %s32, 0
      %p356 = por %p354, %p355
      %p357 = scmp.ne.s32.totalorder %s346, %s349
      %p358 = scmp.eq.s32.totalorder %s37, 3
      %p359 = por %p357, %p358
      %p360 = scmp.ne.s32.totalorder %s349, %s350
      %p361 = scmp.eq.s32.totalorder %s37, 0
      %p362 = por %p360, %p361
      %p363 = scmp.ne.s32.totalorder %s349, %s350
      %p364 = scmp.eq.s32.totalorder %s38, 3
      %p365 = por %p363, %p364
      %p367 = scmp.ne.s32.totalorder %s350, %s366
      %p368 = scmp.eq.s32.totalorder %s38, 0
      %p369 = por %p367, %p368
      %s370 = ssub.s32 %s40, %s47
      %p371 = scmp.eq.s32.totalorder %s370, 0
      %s373 = sadd.s32 %s372, 1
      %s374 = scalar_select %p371, %s372, %s373
      %p377 = pneg %p371
      %p378 = scmp.eq.s32.totalorder %s32, 3
      %p379 = por %p377, %p378
      %p380 = scmp.ne.s32.totalorder %s372, %s375
      %p381 = scmp.eq.s32.totalorder %s32, 0
      %p382 = por %p380, %p381
      %p383 = scmp.ne.s32.totalorder %s372, %s375
      %p384 = scmp.eq.s32.totalorder %s37, 3
      %p385 = por %p383, %p384
      %p386 = scmp.ne.s32.totalorder %s375, %s376
      %p387 = scmp.eq.s32.totalorder %s37, 0
      %p388 = por %p386, %p387
      %p389 = scmp.ne.s32.totalorder %s375, %s376
      %p390 = scmp.eq.s32.totalorder %s38, 3
      %p391 = por %p389, %p390
      %p393 = scmp.ne.s32.totalorder %s376, %s392
      %p394 = scmp.eq.s32.totalorder %s38, 0
      %p395 = por %p393, %p394
      %s396 = ssub.s32 %s40, %s47
      %p397 = scmp.eq.s32.totalorder %s396, 0
      %s399 = sadd.s32 %s398, 1
      %s400 = scalar_select %p397, %s398, %s399
      %p403 = pneg %p397
      %p404 = scmp.eq.s32.totalorder %s32, 3
      %p405 = por %p403, %p404
      %p406 = scmp.ne.s32.totalorder %s398, %s401
      %p407 = scmp.eq.s32.totalorder %s32, 0
      %p408 = por %p406, %p407
      %p409 = scmp.ne.s32.totalorder %s398, %s401
      %p410 = scmp.eq.s32.totalorder %s37, 3
      %p411 = por %p409, %p410
      %p412 = scmp.ne.s32.totalorder %s401, %s402
      %p413 = scmp.eq.s32.totalorder %s37, 0
      %p414 = por %p412, %p413
      %p415 = scmp.ne.s32.totalorder %s401, %s402
      %p416 = scmp.eq.s32.totalorder %s38, 3
      %p417 = por %p415, %p416
      %p419 = scmp.ne.s32.totalorder %s402, %s418
      %p420 = scmp.eq.s32.totalorder %s38, 0
      %p421 = por %p419, %p420
      %s422 = ssub.s32 %s40, %s47
      %p423 = scmp.eq.s32.totalorder %s422, 0
      %s425 = sadd.s32 %s424, 1
      %s426 = scalar_select %p423, %s424, %s425
      %p429 = pneg %p423
      %p430 = scmp.eq.s32.totalorder %s32, 3
      %p431 = por %p429, %p430
      %p432 = scmp.ne.s32.totalorder %s424, %s427
      %p433 = scmp.eq.s32.totalorder %s32, 0
      %p434 = por %p432, %p433
      %p435 = scmp.ne.s32.totalorder %s424, %s427
      %p436 = scmp.eq.s32.totalorder %s37, 3
      %p437 = por %p435, %p436
      %p438 = scmp.ne.s32.totalorder %s427, %s428
      %p439 = scmp.eq.s32.totalorder %s37, 0
      %p440 = por %p438, %p439
      %p441 = scmp.ne.s32.totalorder %s427, %s428
      %p442 = scmp.eq.s32.totalorder %s38, 3
      %p443 = por %p441, %p442
      %p445 = scmp.ne.s32.totalorder %s428, %s444
      %p446 = scmp.eq.s32.totalorder %s38, 0
      %p447 = por %p445, %p446
      %s448 = ssub.s32 %s40, %s47
      %p449 = scmp.eq.s32.totalorder %s448, 0
      %s451 = sadd.s32 %s450, 1
      %s452 = scalar_select %p449, %s450, %s451
      %p455 = pneg %p449
      %p456 = scmp.eq.s32.totalorder %s32, 3
      %p457 = por %p455, %p456
      %p458 = scmp.ne.s32.totalorder %s450, %s453
      %p459 = scmp.eq.s32.totalorder %s32, 0
      %p460 = por %p458, %p459
      %p461 = scmp.ne.s32.totalorder %s450, %s453
      %p462 = scmp.eq.s32.totalorder %s37, 3
      %p463 = por %p461, %p462
      %p464 = scmp.ne.s32.totalorder %s453, %s454
      %p465 = scmp.eq.s32.totalorder %s37, 0
      %p466 = por %p464, %p465
      %p467 = scmp.ne.s32.totalorder %s453, %s454
      %p468 = scmp.eq.s32.totalorder %s38, 3
      %p469 = por %p467, %p468
      %p471 = scmp.ne.s32.totalorder %s454, %s470
      %p472 = scmp.eq.s32.totalorder %s38, 0
      %p473 = por %p471, %p472
      %s474 = ssub.s32 %s39, %s51
      %p475 = scmp.eq.s32.totalorder %s474, 0
      %s477 = sadd.s32 %s476, 1
      %s478 = scalar_select %p475, %s476, %s477
      %p481 = pneg %p475
      %p482 = scmp.eq.s32.totalorder %s32, 3
      %p483 = por %p481, %p482
      %p484 = scmp.ne.s32.totalorder %s476, %s479
      %p485 = scmp.eq.s32.totalorder %s32, 0
      %p486 = por %p484, %p485
      %p487 = scmp.ne.s32.totalorder %s476, %s479
      %p488 = scmp.eq.s32.totalorder %s37, 3
      %p489 = por %p487, %p488
      %p490 = scmp.ne.s32.totalorder %s479, %s480
      %p491 = scmp.eq.s32.totalorder %s37, 0
      %p492 = por %p490, %p491
      %p493 = scmp.ne.s32.totalorder %s479, %s480
      %p494 = scmp.eq.s32.totalorder %s38, 3
      %p495 = por %p493, %p494
      %p497 = scmp.ne.s32.totalorder %s480, %s496
      %p498 = scmp.eq.s32.totalorder %s38, 0
      %p499 = por %p497, %p498
      %s500 = ssub.s32 %s39, %s51
      %s501 = ssub.s32 %s40, %s47
      %s502 = sor.u32 %s500, %s501
      %p503 = scmp.eq.s32.totalorder %s502, 0
      %s505 = sadd.s32 %s504, 1
      %s506 = scalar_select %p503, %s504, %s505
      %p509 = pneg %p503
      %p510 = scmp.eq.s32.totalorder %s32, 3
      %p511 = por %p509, %p510
      %p512 = scmp.ne.s32.totalorder %s504, %s507
      %p513 = scmp.eq.s32.totalorder %s32, 0
      %p514 = por %p512, %p513
      %p515 = scmp.ne.s32.totalorder %s504, %s507
      %p516 = scmp.eq.s32.totalorder %s37, 3
      %p517 = por %p515, %p516
      %p518 = scmp.ne.s32.totalorder %s507, %s508
      %p519 = scmp.eq.s32.totalorder %s37, 0
      %p520 = por %p518, %p519
      %p521 = scmp.ne.s32.totalorder %s507, %s508
      %p522 = scmp.eq.s32.totalorder %s38, 3
      %p523 = por %p521, %p522
      %p525 = scmp.ne.s32.totalorder %s508, %s524
      %p526 = scmp.eq.s32.totalorder %s38, 0
      %p527 = por %p525, %p526
      %s528 = ssub.s32 %s39, %s51
      %s529 = ssub.s32 %s40, %s47
      %s530 = sor.u32 %s528, %s529
      %p531 = scmp.eq.s32.totalorder %s530, 0
      %s533 = sadd.s32 %s532, 1
      %s534 = scalar_select %p531, %s532, %s533
      %p537 = pneg %p531
      %p538 = scmp.eq.s32.totalorder %s32, 3
      %p539 = por %p537, %p538
      %p540 = scmp.ne.s32.totalorder %s532, %s535
      %p541 = scmp.eq.s32.totalorder %s32, 0
      %p542 = por %p540, %p541
      %p543 = scmp.ne.s32.totalorder %s532, %s535
      %p544 = scmp.eq.s32.totalorder %s37, 3
      %p545 = por %p543, %p544
      %p546 = scmp.ne.s32.totalorder %s535, %s536
      %p547 = scmp.eq.s32.totalorder %s37, 0
      %p548 = por %p546, %p547
      %p549 = scmp.ne.s32.totalorder %s535, %s536
      %p550 = scmp.eq.s32.totalorder %s38, 3
      %p551 = por %p549, %p550
      %p553 = scmp.ne.s32.totalorder %s536, %s552
      %p554 = scmp.eq.s32.totalorder %s38, 0
      %p555 = por %p553, %p554
      %p556 = scmp.le.s32.totalorder 1, %s32
      %p557 = scmp.lt.s32.totalorder %s32, 5
      %p558 = pnand %p556, %p557
      %p559 = pneg %p558
      // Predicated region
      $region9: #{tpu_custom_call.1} parent=5 // pred_check
        _
      $region10: #{tpu_custom_call.1} parent=5 // pred_check_branch
        %561 = sbr.rel (%p558) target = $region12
      $region11: #{tpu_custom_call.1} parent=5 // pred_region
        %s562 = ssub.s32 %s32, 1
        // Predicated region
        $region13: #{tpu_custom_call.1} parent=11 // pred_check
          %p563 = pneg %p91
        $region14: #{tpu_custom_call.1} parent=11 // pred_check_branch
          %565 = sbr.rel (%p563) target = $region16
        $region15: #{tpu_custom_call.1} parent=11 // pred_region
          _
        $region16: #{tpu_custom_call.1} parent=11 // pred_fallthru
          _
        // Predicated region
        $region17: #{tpu_custom_call.1} parent=11 // pred_check
          %p566 = pneg %p112
        $region18: #{tpu_custom_call.1} parent=11 // pred_check_branch
          %568 = sbr.rel (%p566) target = $region20
        $region19: #{tpu_custom_call.1} parent=11 // pred_region
          _
        $region20: #{tpu_custom_call.1} parent=11 // pred_fallthru
          _
        // Predicated region
        $region21: #{tpu_custom_call.1} parent=11 // pred_check
          %p569 = pneg %p133
        $region22: #{tpu_custom_call.1} parent=11 // pred_check_branch
          %571 = sbr.rel (%p569) target = $region24
        $region23: #{tpu_custom_call.1} parent=11 // pred_region
          _
        $region24: #{tpu_custom_call.1} parent=11 // pred_fallthru
          _
        // Predicated region
        $region25: #{tpu_custom_call.1} parent=11 // pred_check
          %p572 = pneg %p154
        $region26: #{tpu_custom_call.1} parent=11 // pred_check_branch
          %574 = sbr.rel (%p572) target = $region28
        $region27: #{tpu_custom_call.1} parent=11 // pred_region
          _
        $region28: #{tpu_custom_call.1} parent=11 // pred_fallthru
          _
      $region12: #{tpu_custom_call.1} parent=5 // pred_fallthru
        _
      %p575 = scmp.lt.s32.totalorder %s32, 4
      // Predicated region
      $region29: #{tpu_custom_call.1} parent=5 // pred_check
        %p576 = pneg %p575
      $region30: #{tpu_custom_call.1} parent=5 // pred_check_branch
        %578 = sbr.rel (%p576) target = $region32
      $region31: #{tpu_custom_call.1} parent=5 // pred_region
        // Predicated region
        $region33: #{tpu_custom_call.1} parent=31 // pred_check
          %p579 = pneg %p64
        $region34: #{tpu_custom_call.1} parent=31 // pred_check_branch
          %581 = sbr.rel (%p579) target = $region36
        $region35: #{tpu_custom_call.1} parent=31 // pred_region
          %p582 = scmp.lt.s32.totalorder %s39, 1
          %s583 = scalar_select %p582, %s39, 1
          %s584 = smul.addr %s583, 2
          %s585 = smul.addr %s584, 8
          %s586 = scalar_lea.vmem %s0, %s585
        $region36: #{tpu_custom_call.1} parent=31 // pred_fallthru
          _
        // Predicated region
        $region37: #{tpu_custom_call.1} parent=31 // pred_check
          %p587 = pneg %p174
        $region38: #{tpu_custom_call.1} parent=31 // pred_check_branch
          %589 = sbr.rel (%p587) target = $region40
        $region39: #{tpu_custom_call.1} parent=31 // pred_region
          %p590 = scmp.lt.s32.totalorder %s40, 1
          %s591 = scalar_select %p590, %s40, 1
          %s592 = smul.addr %s591, 4
          %s593 = smul.addr %s592, 4
          %s594 = scalar_lea.vmem %s5, %s593
        $region40: #{tpu_custom_call.1} parent=31 // pred_fallthru
          _
        // Predicated region
        $region41: #{tpu_custom_call.1} parent=31 // pred_check
          %p595 = pneg %p200
        $region42: #{tpu_custom_call.1} parent=31 // pred_check_branch
          %597 = sbr.rel (%p595) target = $region44
        $region43: #{tpu_custom_call.1} parent=31 // pred_region
          %p598 = scmp.lt.s32.totalorder %s40, 1
          %s599 = scalar_select %p598, %s40, 1
          %s600 = scalar_lea.vmem %s6, %s599
        $region44: #{tpu_custom_call.1} parent=31 // pred_fallthru
          _
        // Predicated region
        $region45: #{tpu_custom_call.1} parent=31 // pred_check
          %p601 = pneg %p226
        $region46: #{tpu_custom_call.1} parent=31 // pred_check_branch
          %603 = sbr.rel (%p601) target = $region48
        $region47: #{tpu_custom_call.1} parent=31 // pred_region
          %p604 = scmp.lt.s32.totalorder %s40, 1
          %s605 = scalar_select %p604, %s40, 1
          %s606 = smul.addr %s605, 4
          %s607 = smul.addr %s606, 4
          %s608 = scalar_lea.vmem %s7, %s607
        $region48: #{tpu_custom_call.1} parent=31 // pred_fallthru
          _
        // Predicated region
        $region49: #{tpu_custom_call.1} parent=31 // pred_check
          %p609 = pneg %p252
        $region50: #{tpu_custom_call.1} parent=31 // pred_check_branch
          %611 = sbr.rel (%p609) target = $region52
        $region51: #{tpu_custom_call.1} parent=31 // pred_region
          %p612 = scmp.lt.s32.totalorder %s40, 1
          %s613 = scalar_select %p612, %s40, 1
          %s614 = scalar_lea.vmem %s8, %s613
        $region52: #{tpu_custom_call.1} parent=31 // pred_fallthru
          _
        // Predicated region
        $region53: #{tpu_custom_call.1} parent=31 // pred_check
          %p615 = pneg %p278
        $region54: #{tpu_custom_call.1} parent=31 // pred_check_branch
          %617 = sbr.rel (%p615) target = $region56
        $region55: #{tpu_custom_call.1} parent=31 // pred_region
          %p618 = scmp.lt.s32.totalorder %s40, 1
          %s619 = scalar_select %p618, %s40, 1
          %s620 = scalar_lea.vmem %s9, %s619
        $region56: #{tpu_custom_call.1} parent=31 // pred_fallthru
          _
        // Predicated region
        $region57: #{tpu_custom_call.1} parent=31 // pred_check
          %p621 = pneg %p304
        $region58: #{tpu_custom_call.1} parent=31 // pred_check_branch
          %623 = sbr.rel (%p621) target = $region60
        $region59: #{tpu_custom_call.1} parent=31 // pred_region
          %p624 = scmp.lt.s32.totalorder %s40, 1
          %s625 = scalar_select %p624, %s40, 1
          %s626 = scalar_lea.vmem %s10, %s625
        $region60: #{tpu_custom_call.1} parent=31 // pred_fallthru
          _
        // Predicated region
        $region61: #{tpu_custom_call.1} parent=31 // pred_check
          %p627 = pneg %p330
        $region62: #{tpu_custom_call.1} parent=31 // pred_check_branch
          %629 = sbr.rel (%p627) target = $region64
        $region63: #{tpu_custom_call.1} parent=31 // pred_region
          %p630 = scmp.lt.s32.totalorder %s40, 1
          %s631 = scalar_select %p630, %s40, 1
          %s632 = smul.addr %s631, 4
          %s633 = smul.addr %s632, 4
          %s634 = scalar_lea.vmem %s11, %s633
        $region64: #{tpu_custom_call.1} parent=31 // pred_fallthru
          _
        // Predicated region
        $region65: #{tpu_custom_call.1} parent=31 // pred_check
          %p635 = pneg %p356
        $region66: #{tpu_custom_call.1} parent=31 // pred_check_branch
          %637 = sbr.rel (%p635) target = $region68
        $region67: #{tpu_custom_call.1} parent=31 // pred_region
          %p638 = scmp.lt.s32.totalorder %s40, 1
          %s639 = scalar_select %p638, %s40, 1
          %s640 = scalar_lea.vmem %s12, %s639
        $region68: #{tpu_custom_call.1} parent=31 // pred_fallthru
          _
        // Predicated region
        $region69: #{tpu_custom_call.1} parent=31 // pred_check
          %p641 = pneg %p382
        $region70: #{tpu_custom_call.1} parent=31 // pred_check_branch
          %643 = sbr.rel (%p641) target = $region72
        $region71: #{tpu_custom_call.1} parent=31 // pred_region
          %p644 = scmp.lt.s32.totalorder %s40, 1
          %s645 = scalar_select %p644, %s40, 1
          %s646 = smul.addr %s645, 16
          %s647 = smul.addr %s646, 4
          %s648 = scalar_lea.vmem %s13, %s647
        $region72: #{tpu_custom_call.1} parent=31 // pred_fallthru
          _
        // Predicated region
        $region73: #{tpu_custom_call.1} parent=31 // pred_check
          %p649 = pneg %p408
        $region74: #{tpu_custom_call.1} parent=31 // pred_check_branch
          %651 = sbr.rel (%p649) target = $region76
        $region75: #{tpu_custom_call.1} parent=31 // pred_region
          %p652 = scmp.lt.s32.totalorder %s40, 1
          %s653 = scalar_select %p652, %s40, 1
          %s654 = scalar_lea.vmem %s14, %s653
        $region76: #{tpu_custom_call.1} parent=31 // pred_fallthru
          _
        // Predicated region
        $region77: #{tpu_custom_call.1} parent=31 // pred_check
          %p655 = pneg %p434
        $region78: #{tpu_custom_call.1} parent=31 // pred_check_branch
          %657 = sbr.rel (%p655) target = $region80
        $region79: #{tpu_custom_call.1} parent=31 // pred_region
          %p658 = scmp.lt.s32.totalorder %s40, 1
          %s659 = scalar_select %p658, %s40, 1
          %s660 = scalar_lea.vmem %s15, %s659
        $region80: #{tpu_custom_call.1} parent=31 // pred_fallthru
          _
        // Predicated region
        $region81: #{tpu_custom_call.1} parent=31 // pred_check
          %p661 = pneg %p460
        $region82: #{tpu_custom_call.1} parent=31 // pred_check_branch
          %663 = sbr.rel (%p661) target = $region84
        $region83: #{tpu_custom_call.1} parent=31 // pred_region
          %p664 = scmp.lt.s32.totalorder %s40, 1
          %s665 = scalar_select %p664, %s40, 1
          %s666 = scalar_lea.vmem %s16, %s665
        $region84: #{tpu_custom_call.1} parent=31 // pred_fallthru
          _
      $region32: #{tpu_custom_call.1} parent=5 // pred_fallthru
        _
      %p667 = scmp.le.s32.totalorder 1, %s32
      %p668 = scmp.lt.s32.totalorder %s32, 5
      %p669 = pnand %p667, %p668
      %p670 = pneg %p669
      // Predicated region
      $region85: #{tpu_custom_call.1} parent=5 // pred_check
        _
      $region86: #{tpu_custom_call.1} parent=5 // pred_check_branch
        %672 = sbr.rel (%p669) target = $region88
      $region87: #{tpu_custom_call.1} parent=5 // pred_region
        %s673 = ssub.s32 %s32, 1
        %p674 = scmp.lt.s32.totalorder %s41, 1
        %s675 = scalar_select %p674, %s41, 1
        %s676 = smul.addr %s675, 2
        %s677 = smul.addr %s676, 8
        %s678 = scalar_lea.vmem %s0, %s677
        %p679 = pneg %p70
        %p680 = pneg %p67
        %p681 = pneg %p91
        %p682 = pneg %p88
        %p683 = pneg %p112
        %p684 = pneg %p109
        %p685 = pneg %p133
        %p686 = pneg %p130
        %p687 = pneg %p154
        %p688 = pneg %p151
        %p689 = scmp.lt.s32.totalorder %s42, 1
        %s690 = scalar_select %p689, %s42, 1
        %s691 = smul.addr %s690, 4
        %s692 = smul.addr %s691, 4
        %s693 = scalar_lea.vmem %s5, %s692
        %p694 = pneg %p180
        %p695 = pneg %p177
        %p696 = scmp.lt.s32.totalorder %s42, 1
        %s697 = scalar_select %p696, %s42, 1
        %s698 = scalar_lea.vmem %s6, %s697
        %p699 = pneg %p206
        %p700 = pneg %p203
        %p701 = scmp.lt.s32.totalorder %s42, 1
        %s702 = scalar_select %p701, %s42, 1
        %s703 = smul.addr %s702, 4
        %s704 = smul.addr %s703, 4
        %s705 = scalar_lea.vmem %s7, %s704
        %p706 = pneg %p232
        %p707 = pneg %p229
        %p708 = scmp.lt.s32.totalorder %s42, 1
        %s709 = scalar_select %p708, %s42, 1
        %s710 = scalar_lea.vmem %s8, %s709
        %p711 = pneg %p258
        %p712 = pneg %p255
        %p713 = scmp.lt.s32.totalorder %s42, 1
        %s714 = scalar_select %p713, %s42, 1
        %s715 = scalar_lea.vmem %s9, %s714
        %p716 = pneg %p284
        %p717 = pneg %p281
        %p718 = scmp.lt.s32.totalorder %s42, 1
        %s719 = scalar_select %p718, %s42, 1
        %s720 = scalar_lea.vmem %s10, %s719
        %p721 = pneg %p310
        %p722 = pneg %p307
        %p723 = scmp.lt.s32.totalorder %s42, 1
        %s724 = scalar_select %p723, %s42, 1
        %s725 = smul.addr %s724, 4
        %s726 = smul.addr %s725, 4
        %s727 = scalar_lea.vmem %s11, %s726
        %p728 = pneg %p336
        %p729 = pneg %p333
        %p730 = scmp.lt.s32.totalorder %s42, 1
        %s731 = scalar_select %p730, %s42, 1
        %s732 = scalar_lea.vmem %s12, %s731
        %p733 = pneg %p362
        %p734 = pneg %p359
        %p735 = scmp.lt.s32.totalorder %s42, 1
        %s736 = scalar_select %p735, %s42, 1
        %s737 = smul.addr %s736, 16
        %s738 = smul.addr %s737, 4
        %s739 = scalar_lea.vmem %s13, %s738
        %p740 = pneg %p388
        %p741 = pneg %p385
        %p742 = scmp.lt.s32.totalorder %s42, 1
        %s743 = scalar_select %p742, %s42, 1
        %s744 = scalar_lea.vmem %s14, %s743
        %p745 = pneg %p414
        %p746 = pneg %p411
        %p747 = scmp.lt.s32.totalorder %s42, 1
        %s748 = scalar_select %p747, %s42, 1
        %s749 = scalar_lea.vmem %s15, %s748
        %p750 = pneg %p440
        %p751 = pneg %p437
        %p752 = scmp.lt.s32.totalorder %s42, 1
        %s753 = scalar_select %p752, %s42, 1
        %s754 = scalar_lea.vmem %s16, %s753
        %p755 = pneg %p466
        %p756 = pneg %p463
        %p757 = pneg %p492
        %p758 = pneg %p489
        %s759 = sand.u32 %s479, 1
        %s760 = scalar_lea.sflag [#allocation4], %s759
        %s761 = sand.u32 %s479, 1
        %s762 = smul.addr %s761, 8
        %s763 = scalar_lea.vmem [#allocation3], %s762
        %p764 = pneg %p520
        %p765 = pneg %p517
        %s766 = sand.u32 %s37, 1
        %s767 = scalar_lea.sflag [#allocation6], %s766
        %s768 = sand.u32 %s507, 1
        %s769 = smul.addr %s768, 4
        %s770 = scalar_lea.vmem [#allocation5], %s769
        %p771 = pneg %p548
        %p772 = pneg %p545
        %s773 = sand.u32 %s37, 1
        %s774 = scalar_lea.sflag [#allocation6], %s773
        %s775 = sand.u32 %s535, 1
        %s776 = smul.addr %s775, 4
        %s777 = scalar_lea.vmem [#allocation7], %s776
        %p778 = scmp.lt.s32.totalorder %s41, 1
        %s779 = scalar_select %p778, %s41, 1
        %s780 = smul.addr %s779, 2
        %s781 = smul.addr %s780, 8
        %s782 = scalar_lea.vmem %s0, %s781
        %p783 = scmp.lt.s32.totalorder %s42, 1
        %s784 = scalar_select %p783, %s42, 1
        %s785 = smul.addr %s784, 4
        %s786 = smul.addr %s785, 4
        %s787 = scalar_lea.vmem %s5, %s786
        %p788 = scmp.lt.s32.totalorder %s42, 1
        %s789 = scalar_select %p788, %s42, 1
        %s790 = scalar_lea.vmem %s6, %s789
        %p791 = scmp.lt.s32.totalorder %s42, 1
        %s792 = scalar_select %p791, %s42, 1
        %s793 = smul.addr %s792, 4
        %s794 = smul.addr %s793, 4
        %s795 = scalar_lea.vmem %s7, %s794
        %p796 = scmp.lt.s32.totalorder %s42, 1
        %s797 = scalar_select %p796, %s42, 1
        %s798 = scalar_lea.vmem %s8, %s797
        %p799 = scmp.lt.s32.totalorder %s42, 1
        %s800 = scalar_select %p799, %s42, 1
        %s801 = scalar_lea.vmem %s9, %s800
        %p802 = scmp.lt.s32.totalorder %s42, 1
        %s803 = scalar_select %p802, %s42, 1
        %s804 = scalar_lea.vmem %s10, %s803
        %p805 = scmp.lt.s32.totalorder %s42, 1
        %s806 = scalar_select %p805, %s42, 1
        %s807 = smul.addr %s806, 4
        %s808 = smul.addr %s807, 4
        %s809 = scalar_lea.vmem %s11, %s808
        %p810 = scmp.lt.s32.totalorder %s42, 1
        %s811 = scalar_select %p810, %s42, 1
        %s812 = scalar_lea.vmem %s12, %s811
        %p813 = scmp.lt.s32.totalorder %s42, 1
        %s814 = scalar_select %p813, %s42, 1
        %s815 = smul.addr %s814, 16
        %s816 = smul.addr %s815, 4
        %s817 = scalar_lea.vmem %s13, %s816
        %p818 = scmp.lt.s32.totalorder %s42, 1
        %s819 = scalar_select %p818, %s42, 1
        %s820 = scalar_lea.vmem %s14, %s819
        %p821 = scmp.lt.s32.totalorder %s42, 1
        %s822 = scalar_select %p821, %s42, 1
        %s823 = scalar_lea.vmem %s15, %s822
        %p824 = scmp.lt.s32.totalorder %s42, 1
        %s825 = scalar_select %p824, %s42, 1
        %s826 = scalar_lea.vmem %s16, %s825
        %p828 = scmp.eq.s32.totalorder %s42, 0
        // Predicated region
        $region89: #{tpu_custom_call.1} parent=87 // pred_check
          %p829 = pneg %p828
        $region90: #{tpu_custom_call.1} parent=87 // pred_check_branch
          %831 = sbr.rel (%p829) target = $region92
        $region91: #{tpu_custom_call.1} parent=87 // pred_region
          %v832 = vld [vmem:[%s782] sm:$0xff]
          %v833 = vld [vmem:[%s782 + $0x8] sm:$0xf]
          %v834 = vpack.c.bf16 %v832, %v832
          %v835 = vld [vmem:[%s1] sm:$0xf]
          %v836 = vld [vmem:[%s1 + $0x4] sm:$0xf]
          %v837 = vpack.c.bf16 %v833, %v832
          %s838 = scalar_lea.vmem %s1, 8
          %v839 = vld [vmem:[%s838] sm:$0xf]
          %v840 = vld [vmem:[%s838 + $0x4] sm:$0xf]
          %v842 = vshrl.u32 %v837, 16
          %v844 = vshll.u32 %v837, 16
          %v846 = vrot.slane %v844, 1
          %v847 = vor.u32 %v842, %v846
          %v850 = vunpack.c.l.b16 %v839
          %v851 = vunpack.c.l.b16 %v840
          %v852 = vpack.c.b16 %v851, %v850
          %vm854 = vcmask 130048
          %v856 = vsel %vm854, %v847, 0
          %858 = vmatprep.subr.bf16.mxu0 0
          %859 = vmatpush1.bf16.msra.mxu0 %v852
          %860 = vmatprep.subr.bf16.mxu0 0
          %861 = vmatpush1.bf16.msra.mxu0 0
          %862 = vmatprep.subr.bf16.mxu0 0
          %863 = vmatpush1.bf16.msra.mxu0 0
          %864 = vmatprep.subr.bf16.mxu0 0
          %865 = vmatpush1.bf16.msra.mxu0 0
          %866 = vmatprep.subr.bf16.mxu0 0
          %867 = vmatpush1.bf16.msra.mxu0 0
          %868 = vmatprep.subr.bf16.mxu0 0
          %869 = vmatpush1.bf16.msra.mxu0 0
          %870 = vmatprep.subr.bf16.mxu0 0
          %871 = vmatpush1.bf16.msra.mxu0 0
          %872 = vmatprep.subr.bf16.mxu0 0
          %873 = vmatpush1.bf16.msra.mxu0 0
          %874 = vmatprep.subr.bf16.mxu0 0
          %875 = vmatpush1.bf16.msra.mxu0 0
          %876 = vmatprep.subr.bf16.mxu0 0
          %877 = vmatpush1.bf16.msra.mxu0 0
          %878 = vmatprep.subr.bf16.mxu0 0
          %879 = vmatpush1.bf16.msra.mxu0 0
          %880 = vmatprep.subr.bf16.mxu0 0
          %881 = vmatpush1.bf16.msra.mxu0 0
          %882 = vmatprep.subr.bf16.mxu0 0
          %883 = vmatpush1.bf16.msra.mxu0 0
          %884 = vmatprep.subr.bf16.mxu0 0
          %885 = vmatpush1.bf16.msra.mxu0 0
          %886 = vmatprep.subr.bf16.mxu0 0
          %887 = vmatpush1.bf16.msra.mxu0 0
          %888 = vmatprep.subr.bf16.mxu0 0
          %889 = vmatpush1.bf16.msra.mxu0 0
          %890 = vmatprep.mubr.bf16.mxu0 0
          %891 = vmatmul.mubr.bf16.gmra.mrb[0].mxu0 %v856
          %v892 = vpop.f32.mrb[0].mxu0
          %v893 = vadd.f32 0.0, %v892
          %v894 = vpop.f32.mrb[0].mxu0
          %v895 = vpop.f32.mrb[0].mxu0
          %v896 = vpop.f32.mrb[0].mxu0
          %897 = vdwg.mxu0
          %v900 = vunpack.c.l.b16 %v835
          %v901 = vunpack.c.l.b16 %v836
          %v902 = vpack.c.b16 %v901, %v900
          %v905 = vsel %vm854, %v834, 0
          %907 = vmatprep.subr.bf16.mxu0 0
          %908 = vmatpush1.bf16.msra.mxu0 %v902
          %909 = vmatprep.subr.bf16.mxu0 0
          %910 = vmatpush1.bf16.msra.mxu0 0
          %911 = vmatprep.subr.bf16.mxu0 0
          %912 = vmatpush1.bf16.msra.mxu0 0
          %913 = vmatprep.subr.bf16.mxu0 0
          %914 = vmatpush1.bf16.msra.mxu0 0
          %915 = vmatprep.subr.bf16.mxu0 0
          %916 = vmatpush1.bf16.msra.mxu0 0
          %917 = vmatprep.subr.bf16.mxu0 0
          %918 = vmatpush1.bf16.msra.mxu0 0
          %919 = vmatprep.subr.bf16.mxu0 0
          %920 = vmatpush1.bf16.msra.mxu0 0
          %921 = vmatprep.subr.bf16.mxu0 0
          %922 = vmatpush1.bf16.msra.mxu0 0
          %923 = vmatprep.subr.bf16.mxu0 0
          %924 = vmatpush1.bf16.msra.mxu0 0
          %925 = vmatprep.subr.bf16.mxu0 0
          %926 = vmatpush1.bf16.msra.mxu0 0
          %927 = vmatprep.subr.bf16.mxu0 0
          %928 = vmatpush1.bf16.msra.mxu0 0
          %929 = vmatprep.subr.bf16.mxu0 0
          %930 = vmatpush1.bf16.msra.mxu0 0
          %931 = vmatprep.subr.bf16.mxu0 0
          %932 = vmatpush1.bf16.msra.mxu0 0
          %933 = vmatprep.subr.bf16.mxu0 0
          %934 = vmatpush1.bf16.msra.mxu0 0
          %935 = vmatprep.subr.bf16.mxu0 0
          %936 = vmatpush1.bf16.msra.mxu0 0
          %937 = vmatprep.subr.bf16.mxu0 0
          %938 = vmatpush1.bf16.msra.mxu0 0
          %939 = vmatprep.mubr.bf16.mxu0 0
          %940 = vmatmul.mubr.bf16.gmra.mrb[0].mxu0 %v905
          %v941 = vpop.f32.mrb[0].mxu0
          %v942 = vadd.f32 %v893, %v941
          %v943 = vpop.f32.mrb[0].mxu0
          %v944 = vpop.f32.mrb[0].mxu0
          %v945 = vpop.f32.mrb[0].mxu0
          %946 = vdwg.mxu0
          %s947 = scalar_lea.vmem %s1, 16
          %v948 = vld [vmem:[%s947] sm:$0xf]
          %v949 = vld [vmem:[%s947 + $0x4] sm:$0xf]
          %v951 = vrot.slane %v837, 1
          %v954 = vunpack.c.l.b16 %v948
          %v955 = vunpack.c.l.b16 %v949
          %v956 = vpack.c.b16 %v955, %v954
          %v959 = vsel %vm854, %v951, 0
          %961 = vmatprep.subr.bf16.mxu0 0
          %962 = vmatpush1.bf16.msra.mxu0 %v956
          %963 = vmatprep.subr.bf16.mxu0 0
          %964 = vmatpush1.bf16.msra.mxu0 0
          %965 = vmatprep.subr.bf16.mxu0 0
          %966 = vmatpush1.bf16.msra.mxu0 0
          %967 = vmatprep.subr.bf16.mxu0 0
          %968 = vmatpush1.bf16.msra.mxu0 0
          %969 = vmatprep.subr.bf16.mxu0 0
          %970 = vmatpush1.bf16.msra.mxu0 0
          %971 = vmatprep.subr.bf16.mxu0 0
          %972 = vmatpush1.bf16.msra.mxu0 0
          %973 = vmatprep.subr.bf16.mxu0 0
          %974 = vmatpush1.bf16.msra.mxu0 0
          %975 = vmatprep.subr.bf16.mxu0 0
          %976 = vmatpush1.bf16.msra.mxu0 0
          %977 = vmatprep.subr.bf16.mxu0 0
          %978 = vmatpush1.bf16.msra.mxu0 0
          %979 = vmatprep.subr.bf16.mxu0 0
          %980 = vmatpush1.bf16.msra.mxu0 0
          %981 = vmatprep.subr.bf16.mxu0 0
          %982 = vmatpush1.bf16.msra.mxu0 0
          %983 = vmatprep.subr.bf16.mxu0 0
          %984 = vmatpush1.bf16.msra.mxu0 0
          %985 = vmatprep.subr.bf16.mxu0 0
          %986 = vmatpush1.bf16.msra.mxu0 0
          %987 = vmatprep.subr.bf16.mxu0 0
          %988 = vmatpush1.bf16.msra.mxu0 0
          %989 = vmatprep.subr.bf16.mxu0 0
          %990 = vmatpush1.bf16.msra.mxu0 0
          %991 = vmatprep.subr.bf16.mxu0 0
          %992 = vmatpush1.bf16.msra.mxu0 0
          %993 = vmatprep.mubr.bf16.mxu0 0
          %994 = vmatmul.mubr.bf16.gmra.mrb[0].mxu0 %v959
          %v995 = vpop.f32.mrb[0].mxu0
          %v996 = vadd.f32 0.0, %v995
          %v997 = vpop.f32.mrb[0].mxu0
          %v998 = vpop.f32.mrb[0].mxu0
          %v999 = vpop.f32.mrb[0].mxu0
          %1000 = vdwg.mxu0
          %v1001 = vadd.f32 %v942, %v996
          %s1002 = scalar_lea.vmem %s1, 24
          %v1003 = vld [vmem:[%s1002] sm:$0xf]
          %v1004 = vld [vmem:[%s1002 + $0x4] sm:$0xf]
          %v1005 = vrot.slane %v842, 1
          %v1006 = vrot.slane %v844, 2
          %v1007 = vor.u32 %v1005, %v1006
          %v1010 = vunpack.c.l.b16 %v1003
          %v1011 = vunpack.c.l.b16 %v1004
          %v1012 = vpack.c.b16 %v1011, %v1010
          %v1015 = vsel %vm854, %v1007, 0
          %1017 = vmatprep.subr.bf16.mxu0 0
          %1018 = vmatpush1.bf16.msra.mxu0 %v1012
          %1019 = vmatprep.subr.bf16.mxu0 0
          %1020 = vmatpush1.bf16.msra.mxu0 0
          %1021 = vmatprep.subr.bf16.mxu0 0
          %1022 = vmatpush1.bf16.msra.mxu0 0
          %1023 = vmatprep.subr.bf16.mxu0 0
          %1024 = vmatpush1.bf16.msra.mxu0 0
          %1025 = vmatprep.subr.bf16.mxu0 0
          %1026 = vmatpush1.bf16.msra.mxu0 0
          %1027 = vmatprep.subr.bf16.mxu0 0
          %1028 = vmatpush1.bf16.msra.mxu0 0
          %1029 = vmatprep.subr.bf16.mxu0 0
          %1030 = vmatpush1.bf16.msra.mxu0 0
          %1031 = vmatprep.subr.bf16.mxu0 0
          %1032 = vmatpush1.bf16.msra.mxu0 0
          %1033 = vmatprep.subr.bf16.mxu0 0
          %1034 = vmatpush1.bf16.msra.mxu0 0
          %1035 = vmatprep.subr.bf16.mxu0 0
          %1036 = vmatpush1.bf16.msra.mxu0 0
          %1037 = vmatprep.subr.bf16.mxu0 0
          %1038 = vmatpush1.bf16.msra.mxu0 0
          %1039 = vmatprep.subr.bf16.mxu0 0
          %1040 = vmatpush1.bf16.msra.mxu0 0
          %1041 = vmatprep.subr.bf16.mxu0 0
          %1042 = vmatpush1.bf16.msra.mxu0 0
          %1043 = vmatprep.subr.bf16.mxu0 0
          %1044 = vmatpush1.bf16.msra.mxu0 0
          %1045 = vmatprep.subr.bf16.mxu0 0
          %1046 = vmatpush1.bf16.msra.mxu0 0
          %1047 = vmatprep.subr.bf16.mxu0 0
          %1048 = vmatpush1.bf16.msra.mxu0 0
          %1049 = vmatprep.mubr.bf16.mxu0 0
          %1050 = vmatmul.mubr.bf16.gmra.mrb[0].mxu0 %v1015
          %v1051 = vpop.f32.mrb[0].mxu0
          %v1052 = vadd.f32 0.0, %v1051
          %v1053 = vpop.f32.mrb[0].mxu0
          %v1054 = vpop.f32.mrb[0].mxu0
          %v1055 = vpop.f32.mrb[0].mxu0
          %1056 = vdwg.mxu0
          %v1057 = vadd.f32 %v1001, %v1052
          %s1058 = scalar_lea.vmem %s1, 32
          %v1059 = vld [vmem:[%s1058] sm:$0xf]
          %v1060 = vld [vmem:[%s1058 + $0x4] sm:$0xf]
          %s1061 = scalar_lea.vmem %s1, 40
          %v1062 = vld [vmem:[%s1061] sm:$0xf]
          %v1063 = vld [vmem:[%s1061 + $0x4] sm:$0xf]
          %1064 = vrot.lane.b32.xlu0 %v847, 112
          %v1065 = vpop.permute.xlu0 %1064
          %v1068 = vunpack.c.l.b16 %v1062
          %v1069 = vunpack.c.l.b16 %v1063
          %v1070 = vpack.c.b16 %v1069, %v1068
          %v1073 = vsel %vm854, %v1065, 0
          %1075 = vmatprep.subr.bf16.mxu0 0
          %1076 = vmatpush1.bf16.msra.mxu0 %v1070
          %1077 = vmatprep.subr.bf16.mxu0 0
          %1078 = vmatpush1.bf16.msra.mxu0 0
          %1079 = vmatprep.subr.bf16.mxu0 0
          %1080 = vmatpush1.bf16.msra.mxu0 0
          %1081 = vmatprep.subr.bf16.mxu0 0
          %1082 = vmatpush1.bf16.msra.mxu0 0
          %1083 = vmatprep.subr.bf16.mxu0 0
          %1084 = vmatpush1.bf16.msra.mxu0 0
          %1085 = vmatprep.subr.bf16.mxu0 0
          %1086 = vmatpush1.bf16.msra.mxu0 0
          %1087 = vmatprep.subr.bf16.mxu0 0
          %1088 = vmatpush1.bf16.msra.mxu0 0
          %1089 = vmatprep.subr.bf16.mxu0 0
          %1090 = vmatpush1.bf16.msra.mxu0 0
          %1091 = vmatprep.subr.bf16.mxu0 0
          %1092 = vmatpush1.bf16.msra.mxu0 0
          %1093 = vmatprep.subr.bf16.mxu0 0
          %1094 = vmatpush1.bf16.msra.mxu0 0
          %1095 = vmatprep.subr.bf16.mxu0 0
          %1096 = vmatpush1.bf16.msra.mxu0 0
          %1097 = vmatprep.subr.bf16.mxu0 0
          %1098 = vmatpush1.bf16.msra.mxu0 0
          %1099 = vmatprep.subr.bf16.mxu0 0
          %1100 = vmatpush1.bf16.msra.mxu0 0
          %1101 = vmatprep.subr.bf16.mxu0 0
          %1102 = vmatpush1.bf16.msra.mxu0 0
          %1103 = vmatprep.subr.bf16.mxu0 0
          %1104 = vmatpush1.bf16.msra.mxu0 0
          %1105 = vmatprep.subr.bf16.mxu0 0
          %1106 = vmatpush1.bf16.msra.mxu0 0
          %1107 = vmatprep.mubr.bf16.mxu0 0
          %1108 = vmatmul.mubr.bf16.gmra.mrb[0].mxu0 %v1073
          %v1109 = vpop.f32.mrb[0].mxu0
          %v1110 = vadd.f32 0.0, %v1109
          %v1111 = vpop.f32.mrb[0].mxu0
          %v1112 = vpop.f32.mrb[0].mxu0
          %v1113 = vpop.f32.mrb[0].mxu0
          %1114 = vdwg.mxu0
          %1116 = vrot.lane.b32.xlu0 %v834, 112
          %v1117 = vpop.permute.xlu0 %1116
          %v1120 = vunpack.c.l.b16 %v1059
          %v1121 = vunpack.c.l.b16 %v1060
          %v1122 = vpack.c.b16 %v1121, %v1120
          %v1125 = vsel %vm854, %v1117, 0
          %1127 = vmatprep.subr.bf16.mxu0 0
          %1128 = vmatpush1.bf16.msra.mxu0 %v1122
          %1129 = vmatprep.subr.bf16.mxu0 0
          %1130 = vmatpush1.bf16.msra.mxu0 0
          %1131 = vmatprep.subr.bf16.mxu0 0
          %1132 = vmatpush1.bf16.msra.mxu0 0
          %1133 = vmatprep.subr.bf16.mxu0 0
          %1134 = vmatpush1.bf16.msra.mxu0 0
          %1135 = vmatprep.subr.bf16.mxu0 0
          %1136 = vmatpush1.bf16.msra.mxu0 0
          %1137 = vmatprep.subr.bf16.mxu0 0
          %1138 = vmatpush1.bf16.msra.mxu0 0
          %1139 = vmatprep.subr.bf16.mxu0 0
          %1140 = vmatpush1.bf16.msra.mxu0 0
          %1141 = vmatprep.subr.bf16.mxu0 0
          %1142 = vmatpush1.bf16.msra.mxu0 0
          %1143 = vmatprep.subr.bf16.mxu0 0
          %1144 = vmatpush1.bf16.msra.mxu0 0
          %1145 = vmatprep.subr.bf16.mxu0 0
          %1146 = vmatpush1.bf16.msra.mxu0 0
          %1147 = vmatprep.subr.bf16.mxu0 0
          %1148 = vmatpush1.bf16.msra.mxu0 0
          %1149 = vmatprep.subr.bf16.mxu0 0
          %1150 = vmatpush1.bf16.msra.mxu0 0
          %1151 = vmatprep.subr.bf16.mxu0 0
          %1152 = vmatpush1.bf16.msra.mxu0 0
          %1153 = vmatprep.subr.bf16.mxu0 0
          %1154 = vmatpush1.bf16.msra.mxu0 0
          %1155 = vmatprep.subr.bf16.mxu0 0
          %1156 = vmatpush1.bf16.msra.mxu0 0
          %1157 = vmatprep.subr.bf16.mxu0 0
          %1158 = vmatpush1.bf16.msra.mxu0 0
          %1159 = vmatprep.mubr.bf16.mxu0 0
          %1160 = vmatmul.mubr.bf16.gmra.mrb[0].mxu0 %v1125
          %v1161 = vpop.f32.mrb[0].mxu0
          %v1162 = vadd.f32 %v1110, %v1161
          %v1163 = vpop.f32.mrb[0].mxu0
          %v1164 = vpop.f32.mrb[0].mxu0
          %v1165 = vpop.f32.mrb[0].mxu0
          %1166 = vdwg.mxu0
          %s1167 = scalar_lea.vmem %s1, 48
          %v1168 = vld [vmem:[%s1167] sm:$0xf]
          %v1169 = vld [vmem:[%s1167 + $0x4] sm:$0xf]
          %1170 = vrot.lane.b32.xlu0 %v951, 112
          %v1171 = vpop.permute.xlu0 %1170
          %v1174 = vunpack.c.l.b16 %v1168
          %v1175 = vunpack.c.l.b16 %v1169
          %v1176 = vpack.c.b16 %v1175, %v1174
          %v1179 = vsel %vm854, %v1171, 0
          %1181 = vmatprep.subr.bf16.mxu0 0
          %1182 = vmatpush1.bf16.msra.mxu0 %v1176
          %1183 = vmatprep.subr.bf16.mxu0 0
          %1184 = vmatpush1.bf16.msra.mxu0 0
          %1185 = vmatprep.subr.bf16.mxu0 0
          %1186 = vmatpush1.bf16.msra.mxu0 0
          %1187 = vmatprep.subr.bf16.mxu0 0
          %1188 = vmatpush1.bf16.msra.mxu0 0
          %1189 = vmatprep.subr.bf16.mxu0 0
          %1190 = vmatpush1.bf16.msra.mxu0 0
          %1191 = vmatprep.subr.bf16.mxu0 0
          %1192 = vmatpush1.bf16.msra.mxu0 0
          %1193 = vmatprep.subr.bf16.mxu0 0
          %1194 = vmatpush1.bf16.msra.mxu0 0
          %1195 = vmatprep.subr.bf16.mxu0 0
          %1196 = vmatpush1.bf16.msra.mxu0 0
          %1197 = vmatprep.subr.bf16.mxu0 0
          %1198 = vmatpush1.bf16.msra.mxu0 0
          %1199 = vmatprep.subr.bf16.mxu0 0
          %1200 = vmatpush1.bf16.msra.mxu0 0
          %1201 = vmatprep.subr.bf16.mxu0 0
          %1202 = vmatpush1.bf16.msra.mxu0 0
          %1203 = vmatprep.subr.bf16.mxu0 0
          %1204 = vmatpush1.bf16.msra.mxu0 0
          %1205 = vmatprep.subr.bf16.mxu0 0
          %1206 = vmatpush1.bf16.msra.mxu0 0
          %1207 = vmatprep.subr.bf16.mxu0 0
          %1208 = vmatpush1.bf16.msra.mxu0 0
          %1209 = vmatprep.subr.bf16.mxu0 0
          %1210 = vmatpush1.bf16.msra.mxu0 0
          %1211 = vmatprep.subr.bf16.mxu0 0
          %1212 = vmatpush1.bf16.msra.mxu0 0
          %1213 = vmatprep.mubr.bf16.mxu0 0
          %1214 = vmatmul.mubr.bf16.gmra.mrb[0].mxu0 %v1179
          %v1215 = vpop.f32.mrb[0].mxu0
          %v1216 = vadd.f32 0.0, %v1215
          %v1217 = vpop.f32.mrb[0].mxu0
          %v1218 = vpop.f32.mrb[0].mxu0
          %v1219 = vpop.f32.mrb[0].mxu0
          %1220 = vdwg.mxu0
          %v1221 = vadd.f32 %v1162, %v1216
          %s1222 = scalar_lea.vmem %s1, 56
          %v1223 = vld [vmem:[%s1222] sm:$0xf]
          %v1224 = vld [vmem:[%s1222 + $0x4] sm:$0xf]
          %1225 = vrot.lane.b32.xlu0 %v1007, 112
          %v1226 = vpop.permute.xlu0 %1225
          %v1229 = vunpack.c.l.b16 %v1223
          %v1230 = vunpack.c.l.b16 %v1224
          %v1231 = vpack.c.b16 %v1230, %v1229
          %v1234 = vsel %vm854, %v1226, 0
          %1236 = vmatprep.subr.bf16.mxu0 0
          %1237 = vmatpush1.bf16.msra.mxu0 %v1231
          %1238 = vmatprep.subr.bf16.mxu0 0
          %1239 = vmatpush1.bf16.msra.mxu0 0
          %1240 = vmatprep.subr.bf16.mxu0 0
          %1241 = vmatpush1.bf16.msra.mxu0 0
          %1242 = vmatprep.subr.bf16.mxu0 0
          %1243 = vmatpush1.bf16.msra.mxu0 0
          %1244 = vmatprep.subr.bf16.mxu0 0
          %1245 = vmatpush1.bf16.msra.mxu0 0
          %1246 = vmatprep.subr.bf16.mxu0 0
          %1247 = vmatpush1.bf16.msra.mxu0 0
          %1248 = vmatprep.subr.bf16.mxu0 0
          %1249 = vmatpush1.bf16.msra.mxu0 0
          %1250 = vmatprep.subr.bf16.mxu0 0
          %1251 = vmatpush1.bf16.msra.mxu0 0
          %1252 = vmatprep.subr.bf16.mxu0 0
          %1253 = vmatpush1.bf16.msra.mxu0 0
          %1254 = vmatprep.subr.bf16.mxu0 0
          %1255 = vmatpush1.bf16.msra.mxu0 0
          %1256 = vmatprep.subr.bf16.mxu0 0
          %1257 = vmatpush1.bf16.msra.mxu0 0
          %1258 = vmatprep.subr.bf16.mxu0 0
          %1259 = vmatpush1.bf16.msra.mxu0 0
          %1260 = vmatprep.subr.bf16.mxu0 0
          %1261 = vmatpush1.bf16.msra.mxu0 0
          %1262 = vmatprep.subr.bf16.mxu0 0
          %1263 = vmatpush1.bf16.msra.mxu0 0
          %1264 = vmatprep.subr.bf16.mxu0 0
          %1265 = vmatpush1.bf16.msra.mxu0 0
          %1266 = vmatprep.subr.bf16.mxu0 0
          %1267 = vmatpush1.bf16.msra.mxu0 0
          %1268 = vmatprep.mubr.bf16.mxu0 0
          %1269 = vmatmul.mubr.bf16.gmra.mrb[0].mxu0 %v1234
          %v1270 = vpop.f32.mrb[0].mxu0
          %v1271 = vadd.f32 0.0, %v1270
          %v1272 = vpop.f32.mrb[0].mxu0
          %v1273 = vpop.f32.mrb[0].mxu0
          %v1274 = vpop.f32.mrb[0].mxu0
          %1275 = vdwg.mxu0
          %v1276 = vadd.f32 %v1221, %v1271
          %1278 = vrot.lane.b32.xlu0 %v1276, 16
          %v1279 = vpop.permute.xlu0 %1278
          %v1281 = vsel %vm854, %v1057, %v1279
          %v1282 = vld [vmem:[%s2] sm:$0x1]
          %v1284 = vlaneseq
          %v1285 = vshrl.u32 %v1284, 7
          %v1286 = vsub.s32 0, %v1285
          %v1287 = vrot.slane %v1282, %v1286
          %v1289 = vadd.f32 %v1281, %v1287
          %v1290 = vmul.f32 %v1289, 0.5
          %v1291 = vmul.f32 %v1289, 0.70710677
          %v1292 = verf.f32.pop %v1291
          %v1293 = vadd.f32 %v1292, 1.0
          %v1294 = vmul.f32 %v1290, %v1293
          %v1296 = vrot.slane %v1294, 6
          %v1298 = vadd.f32 %v832, %v1296
          %v1299 = vadd.f32 %v833, %v1296
          %v1300 = vld [vmem:[%s3] sm:$0x1]
          %v1301 = vld [vmem:[%s4] sm:$0x1]
          %vm1302 = vcmask 261122
          %v1303 = vsel %vm1302, %v1298, 0.0
          %1304 = vadd.xlane.f32.xlu0 %v1303
          %v1305 = vpop.xlane.xlu0 %1304
          %vm1306 = vcmask 254976
          %v1307 = vsel %vm1306, %v1299, 0.0
          %1308 = vadd.xlane.f32.xlu0 %v1307
          %v1309 = vpop.xlane.xlu0 %1308
          %v1310 = vrcp.pop 32.0
          %v1311 = vmul.f32 %v1305, %v1310
          %v1312 = vmul.f32 %v1309, %v1310
          %v1313 = vsub.f32 %v1298, %v1311
          %v1314 = vsub.f32 %v1299, %v1312
          %v1315 = vmul.f32 %v1313, %v1313
          %v1316 = vmul.f32 %v1314, %v1314
          %v1317 = vsel %vm1302, %v1315, 0.0
          %1318 = vadd.xlane.f32.xlu0 %v1317
          %v1319 = vpop.xlane.xlu0 %1318
          %v1320 = vsel %vm1306, %v1316, 0.0
          %1321 = vadd.xlane.f32.xlu0 %v1320
          %v1322 = vpop.xlane.xlu0 %1321
          %v1323 = vmul.f32 %v1319, %v1310
          %v1324 = vmul.f32 %v1322, %v1310
          %v1325 = vadd.f32 %v1323, 1e-05
          %v1326 = vadd.f32 %v1324, 1e-05
          %v1327 = vrsqrt.pop %v1325
          %v1328 = vrsqrt.pop %v1326
          %v1329 = vmul.f32 %v1313, %v1327
          %v1330 = vmul.f32 %v1314, %v1328
          %v1332 = vlaneseq
          %v1333 = vshrl.u32 %v1332, 7
          %v1334 = vsub.s32 0, %v1333
          %v1335 = vrot.slane %v1300, %v1334
          %v1337 = vmul.f32 %v1329, %v1335
          %v1338 = vmul.f32 %v1330, %v1335
          %v1340 = vlaneseq
          %v1341 = vshrl.u32 %v1340, 7
          %v1342 = vsub.s32 0, %v1341
          %v1343 = vrot.slane %v1301, %v1342
          %v1345 = vadd.f32 %v1337, %v1343
          %v1346 = vadd.f32 %v1338, %v1343
          %1347 = vst.msk [vmem:[#allocation2 - $0x2] sm:$0xfc] %vm1302, %v1345
          %1348 = vst.msk [vmem:[#allocation2 + $0x6] sm:$0x3] %vm1306, %v1346
        $region92: #{tpu_custom_call.1} parent=87 // pred_fallthru
          _
        %v1349 = vld [vmem:[#allocation2] sm:$0xff]
        %v1350 = vpack.c.bf16 %v1349, %v1349
        %v1351 = vld [vmem:[%s787] sm:$0xf]
        %v1352 = vld [vmem:[%s787 + $0x4] sm:$0xf]
        %v1353 = vld [vmem:[%s787 + $0x8] sm:$0xf]
        %v1354 = vld [vmem:[%s787 + $0xc] sm:$0xf]
        %v1355 = vld [vmem:[%s790] sm:$0x1]
        %v1357 = vlaneseq
        %v1358 = vshrl.u32 %v1357, 7
        %v1359 = vsub.s32 0, %v1358
        %v1360 = vrot.slane %v1355, %v1359
        %v1366 = vunpack.c.l.b16 %v1351
        %v1367 = vunpack.c.l.b16 %v1352
        %v1368 = vunpack.c.l.b16 %v1353
        %v1369 = vunpack.c.l.b16 %v1354
        %v1370 = vpack.c.b16 %v1367, %v1366
        %v1371 = vpack.c.b16 %v1369, %v1368
        %vm1374 = vcmask 261120
        %v1376 = vsel %vm1374, %v1350, 0
        %1378 = vmatprep.subr.bf16.mxu0 0
        %1379 = vmatpush1.bf16.msra.mxu0 %v1370
        %1380 = vmatprep.subr.bf16.mxu0 0
        %1381 = vmatpush1.bf16.msra.mxu0 %v1371
        %1382 = vmatprep.subr.bf16.mxu0 0
        %1383 = vmatpush1.bf16.msra.mxu0 0
        %1384 = vmatprep.subr.bf16.mxu0 0
        %1385 = vmatpush1.bf16.msra.mxu0 0
        %1386 = vmatprep.subr.bf16.mxu0 0
        %1387 = vmatpush1.bf16.msra.mxu0 0
        %1388 = vmatprep.subr.bf16.mxu0 0
        %1389 = vmatpush1.bf16.msra.mxu0 0
        %1390 = vmatprep.subr.bf16.mxu0 0
        %1391 = vmatpush1.bf16.msra.mxu0 0
        %1392 = vmatprep.subr.bf16.mxu0 0
        %1393 = vmatpush1.bf16.msra.mxu0 0
        %1394 = vmatprep.subr.bf16.mxu0 0
        %1395 = vmatpush1.bf16.msra.mxu0 0
        %1396 = vmatprep.subr.bf16.mxu0 0
        %1397 = vmatpush1.bf16.msra.mxu0 0
        %1398 = vmatprep.subr.bf16.mxu0 0
        %1399 = vmatpush1.bf16.msra.mxu0 0
        %1400 = vmatprep.subr.bf16.mxu0 0
        %1401 = vmatpush1.bf16.msra.mxu0 0
        %1402 = vmatprep.subr.bf16.mxu0 0
        %1403 = vmatpush1.bf16.msra.mxu0 0
        %1404 = vmatprep.subr.bf16.mxu0 0
        %1405 = vmatpush1.bf16.msra.mxu0 0
        %1406 = vmatprep.subr.bf16.mxu0 0
        %1407 = vmatpush1.bf16.msra.mxu0 0
        %1408 = vmatprep.subr.bf16.mxu0 0
        %1409 = vmatpush1.bf16.msra.mxu0 0
        %1410 = vmatprep.mubr.bf16.mxu0 0
        %1411 = vmatmul.mubr.bf16.gmra.mrb[0].mxu0 %v1376
        %v1412 = vpop.f32.mrb[0].mxu0
        %v1413 = vadd.f32 %v1360, %v1412
        %v1414 = vpop.f32.mrb[0].mxu0
        %v1415 = vpop.f32.mrb[0].mxu0
        %v1416 = vpop.f32.mrb[0].mxu0
        %1417 = vdwg.mxu0
        %1419 = vrot.lane.b32.xlu0 %v1413, 120
        %v1420 = vpop.permute.xlu0 %1419
        %1422 = vrot.lane.b32.xlu0 %v1413, 112
        %v1423 = vpop.permute.xlu0 %1422
        %1425 = vrot.lane.b32.xlu0 %v1413, 104
        %v1426 = vpop.permute.xlu0 %1425
        %v1428 = vpack.c.bf16 %v1413, %v1413
        %v1429 = vpack.c.bf16 %v1420, %v1420
        %v1430 = vpack.c.bf16 %v1423, %v1423
        %v1431 = vpack.c.bf16 %v1426, %v1426
        %1433 = vrot.lane.b32.xlu0 %v1428, 96
        %v1434 = vpop.permute.xlu0 %1433
        %vm1435 = vcmask 64512
        %v1437 = vsel %vm1435, %v1428, 0
        %v1440 = vsel %vm1435, %v1434, 0
        %1442 = vmatprep.subr.bf16.mxu0 0
        %1443 = vmatpush1.bf16.xpose.msra.mxu0 %v1440
        %1444 = vmatprep.subr.bf16.mxu0 0
        %1445 = vmatpush1.bf16.xpose.msra.mxu0 0
        %1446 = vmatprep.subr.bf16.mxu0 0
        %1447 = vmatpush1.bf16.xpose.msra.mxu0 0
        %1448 = vmatprep.subr.bf16.mxu0 0
        %1449 = vmatpush1.bf16.xpose.msra.mxu0 0
        %1450 = vmatprep.subr.bf16.mxu0 0
        %1451 = vmatpush1.bf16.xpose.msra.mxu0 0
        %1452 = vmatprep.subr.bf16.mxu0 0
        %1453 = vmatpush1.bf16.xpose.msra.mxu0 0
        %1454 = vmatprep.subr.bf16.mxu0 0
        %1455 = vmatpush1.bf16.xpose.msra.mxu0 0
        %1456 = vmatprep.subr.bf16.mxu0 0
        %1457 = vmatpush1.bf16.xpose.msra.mxu0 0
        %1458 = vmatprep.subr.bf16.mxu0 0
        %1459 = vmatpush1.bf16.xpose.msra.mxu0 0
        %1460 = vmatprep.subr.bf16.mxu0 0
        %1461 = vmatpush1.bf16.xpose.msra.mxu0 0
        %1462 = vmatprep.subr.bf16.mxu0 0
        %1463 = vmatpush1.bf16.xpose.msra.mxu0 0
        %1464 = vmatprep.subr.bf16.mxu0 0
        %1465 = vmatpush1.bf16.xpose.msra.mxu0 0
        %1466 = vmatprep.subr.bf16.mxu0 0
        %1467 = vmatpush1.bf16.xpose.msra.mxu0 0
        %1468 = vmatprep.subr.bf16.mxu0 0
        %1469 = vmatpush1.bf16.xpose.msra.mxu0 0
        %1470 = vmatprep.subr.bf16.mxu0 0
        %1471 = vmatpush1.bf16.xpose.msra.mxu0 0
        %1472 = vmatprep.subr.bf16.mxu0 0
        %1473 = vmatpush1.bf16.xpose.msra.mxu0 0
        %1474 = vmatprep.mubr.bf16.mxu0 0
        %1475 = vmatmul.mubr.bf16.gmra.mrb[0].mxu0 %v1437
        %v1476 = vpop.f32.mrb[0].mxu0
        %v1477 = vadd.f32 0.0, %v1476
        %v1478 = vpop.f32.mrb[0].mxu0
        %v1479 = vpop.f32.mrb[0].mxu0
        %v1480 = vpop.f32.mrb[0].mxu0
        %1481 = vdwg.mxu0
        %1483 = vrot.lane.b32.xlu0 %v1429, 96
        %v1484 = vpop.permute.xlu0 %1483
        %v1486 = vsel %vm1435, %v1429, 0
        %v1489 = vsel %vm1435, %v1484, 0
        %1491 = vmatprep.subr.bf16.mxu0 0
        %1492 = vmatpush1.bf16.xpose.msra.mxu0 %v1489
        %1493 = vmatprep.subr.bf16.mxu0 0
        %1494 = vmatpush1.bf16.xpose.msra.mxu0 0
        %1495 = vmatprep.subr.bf16.mxu0 0
        %1496 = vmatpush1.bf16.xpose.msra.mxu0 0
        %1497 = vmatprep.subr.bf16.mxu0 0
        %1498 = vmatpush1.bf16.xpose.msra.mxu0 0
        %1499 = vmatprep.subr.bf16.mxu0 0
        %1500 = vmatpush1.bf16.xpose.msra.mxu0 0
        %1501 = vmatprep.subr.bf16.mxu0 0
        %1502 = vmatpush1.bf16.xpose.msra.mxu0 0
        %1503 = vmatprep.subr.bf16.mxu0 0
        %1504 = vmatpush1.bf16.xpose.msra.mxu0 0
        %1505 = vmatprep.subr.bf16.mxu0 0
        %1506 = vmatpush1.bf16.xpose.msra.mxu0 0
        %1507 = vmatprep.subr.bf16.mxu0 0
        %1508 = vmatpush1.bf16.xpose.msra.mxu0 0
        %1509 = vmatprep.subr.bf16.mxu0 0
        %1510 = vmatpush1.bf16.xpose.msra.mxu0 0
        %1511 = vmatprep.subr.bf16.mxu0 0
        %1512 = vmatpush1.bf16.xpose.msra.mxu0 0
        %1513 = vmatprep.subr.bf16.mxu0 0
        %1514 = vmatpush1.bf16.xpose.msra.mxu0 0
        %1515 = vmatprep.subr.bf16.mxu0 0
        %1516 = vmatpush1.bf16.xpose.msra.mxu0 0
        %1517 = vmatprep.subr.bf16.mxu0 0
        %1518 = vmatpush1.bf16.xpose.msra.mxu0 0
        %1519 = vmatprep.subr.bf16.mxu0 0
        %1520 = vmatpush1.bf16.xpose.msra.mxu0 0
        %1521 = vmatprep.subr.bf16.mxu0 0
        %1522 = vmatpush1.bf16.xpose.msra.mxu0 0
        %1523 = vmatprep.mubr.bf16.mxu0 0
        %1524 = vmatmul.mubr.bf16.gmra.mrb[0].mxu0 %v1486
        %v1525 = vpop.f32.mrb[0].mxu0
        %v1526 = vadd.f32 0.0, %v1525
        %v1527 = vpop.f32.mrb[0].mxu0
        %v1528 = vpop.f32.mrb[0].mxu0
        %v1529 = vpop.f32.mrb[0].mxu0
        %1530 = vdwg.mxu0
        %1532 = vrot.lane.b32.xlu0 %v1430, 96
        %v1533 = vpop.permute.xlu0 %1532
        %v1535 = vsel %vm1435, %v1430, 0
        %v1538 = vsel %vm1435, %v1533, 0
        %1540 = vmatprep.subr.bf16.mxu0 0
        %1541 = vmatpush1.bf16.xpose.msra.mxu0 %v1538
        %1542 = vmatprep.subr.bf16.mxu0 0
        %1543 = vmatpush1.bf16.xpose.msra.mxu0 0
        %1544 = vmatprep.subr.bf16.mxu0 0
        %1545 = vmatpush1.bf16.xpose.msra.mxu0 0
        %1546 = vmatprep.subr.bf16.mxu0 0
        %1547 = vmatpush1.bf16.xpose.msra.mxu0 0
        %1548 = vmatprep.subr.bf16.mxu0 0
        %1549 = vmatpush1.bf16.xpose.msra.mxu0 0
        %1550 = vmatprep.subr.bf16.mxu0 0
        %1551 = vmatpush1.bf16.xpose.msra.mxu0 0
        %1552 = vmatprep.subr.bf16.mxu0 0
        %1553 = vmatpush1.bf16.xpose.msra.mxu0 0
        %1554 = vmatprep.subr.bf16.mxu0 0
        %1555 = vmatpush1.bf16.xpose.msra.mxu0 0
        %1556 = vmatprep.subr.bf16.mxu0 0
        %1557 = vmatpush1.bf16.xpose.msra.mxu0 0
        %1558 = vmatprep.subr.bf16.mxu0 0
        %1559 = vmatpush1.bf16.xpose.msra.mxu0 0
        %1560 = vmatprep.subr.bf16.mxu0 0
        %1561 = vmatpush1.bf16.xpose.msra.mxu0 0
        %1562 = vmatprep.subr.bf16.mxu0 0
        %1563 = vmatpush1.bf16.xpose.msra.mxu0 0
        %1564 = vmatprep.subr.bf16.mxu0 0
        %1565 = vmatpush1.bf16.xpose.msra.mxu0 0
        %1566 = vmatprep.subr.bf16.mxu0 0
        %1567 = vmatpush1.bf16.xpose.msra.mxu0 0
        %1568 = vmatprep.subr.bf16.mxu0 0
        %1569 = vmatpush1.bf16.xpose.msra.mxu0 0
        %1570 = vmatprep.subr.bf16.mxu0 0
        %1571 = vmatpush1.bf16.xpose.msra.mxu0 0
        %1572 = vmatprep.mubr.bf16.mxu0 0
        %1573 = vmatmul.mubr.bf16.gmra.mrb[0].mxu0 %v1535
        %v1574 = vpop.f32.mrb[0].mxu0
        %v1575 = vadd.f32 0.0, %v1574
        %v1576 = vpop.f32.mrb[0].mxu0
        %v1577 = vpop.f32.mrb[0].mxu0
        %v1578 = vpop.f32.mrb[0].mxu0
        %1579 = vdwg.mxu0
        %1581 = vrot.lane.b32.xlu0 %v1431, 96
        %v1582 = vpop.permute.xlu0 %1581
        %v1584 = vsel %vm1435, %v1431, 0
        %v1587 = vsel %vm1435, %v1582, 0
        %1589 = vmatprep.subr.bf16.mxu0 0
        %1590 = vmatpush1.bf16.xpose.msra.mxu0 %v1587
        %1591 = vmatprep.subr.bf16.mxu0 0
        %1592 = vmatpush1.bf16.xpose.msra.mxu0 0
        %1593 = vmatprep.subr.bf16.mxu0 0
        %1594 = vmatpush1.bf16.xpose.msra.mxu0 0
        %1595 = vmatprep.subr.bf16.mxu0 0
        %1596 = vmatpush1.bf16.xpose.msra.mxu0 0
        %1597 = vmatprep.subr.bf16.mxu0 0
        %1598 = vmatpush1.bf16.xpose.msra.mxu0 0
        %1599 = vmatprep.subr.bf16.mxu0 0
        %1600 = vmatpush1.bf16.xpose.msra.mxu0 0
        %1601 = vmatprep.subr.bf16.mxu0 0
        %1602 = vmatpush1.bf16.xpose.msra.mxu0 0
        %1603 = vmatprep.subr.bf16.mxu0 0
        %1604 = vmatpush1.bf16.xpose.msra.mxu0 0
        %1605 = vmatprep.subr.bf16.mxu0 0
        %1606 = vmatpush1.bf16.xpose.msra.mxu0 0
        %1607 = vmatprep.subr.bf16.mxu0 0
        %1608 = vmatpush1.bf16.xpose.msra.mxu0 0
        %1609 = vmatprep.subr.bf16.mxu0 0
        %1610 = vmatpush1.bf16.xpose.msra.mxu0 0
        %1611 = vmatprep.subr.bf16.mxu0 0
        %1612 = vmatpush1.bf16.xpose.msra.mxu0 0
        %1613 = vmatprep.subr.bf16.mxu0 0
        %1614 = vmatpush1.bf16.xpose.msra.mxu0 0
        %1615 = vmatprep.subr.bf16.mxu0 0
        %1616 = vmatpush1.bf16.xpose.msra.mxu0 0
        %1617 = vmatprep.subr.bf16.mxu0 0
        %1618 = vmatpush1.bf16.xpose.msra.mxu0 0
        %1619 = vmatprep.subr.bf16.mxu0 0
        %1620 = vmatpush1.bf16.xpose.msra.mxu0 0
        %1621 = vmatprep.mubr.bf16.mxu0 0
        %1622 = vmatmul.mubr.bf16.gmra.mrb[0].mxu0 %v1584
        %v1623 = vpop.f32.mrb[0].mxu0
        %v1624 = vadd.f32 0.0, %v1623
        %v1625 = vpop.f32.mrb[0].mxu0
        %v1626 = vpop.f32.mrb[0].mxu0
        %v1627 = vpop.f32.mrb[0].mxu0
        %1628 = vdwg.mxu0
        %v1629 = vsel %vm1435, %v1477, -inf
        %1630 = vmax.xlane.f32.xlu0 %v1629
        %v1631 = vpop.xlane.xlu0 %1630
        %v1632 = vsel %vm1435, %v1526, -inf
        %1633 = vmax.xlane.f32.xlu0 %v1632
        %v1634 = vpop.xlane.xlu0 %1633
        %v1635 = vsel %vm1435, %v1575, -inf
        %1636 = vmax.xlane.f32.xlu0 %v1635
        %v1637 = vpop.xlane.xlu0 %1636
        %v1638 = vsel %vm1435, %v1624, -inf
        %1639 = vmax.xlane.f32.xlu0 %v1638
        %v1640 = vpop.xlane.xlu0 %1639
        %v1641 = vsub.f32 %v1477, %v1631
        %v1642 = vsub.f32 %v1526, %v1634
        %v1643 = vsub.f32 %v1575, %v1637
        %v1644 = vsub.f32 %v1624, %v1640
        %v1645 = vmul.f32 %v1641, 1.442695
        %v1646 = vpow.pop %v1645
        %v1647 = vmul.f32 %v1642, 1.442695
        %v1648 = vpow.pop %v1647
        %v1649 = vmul.f32 %v1643, 1.442695
        %v1650 = vpow.pop %v1649
        %v1651 = vmul.f32 %v1644, 1.442695
        %v1652 = vpow.pop %v1651
        %v1653 = vsel %vm1435, %v1646, 0.0
        %1654 = vadd.xlane.f32.xlu0 %v1653
        %v1655 = vpop.xlane.xlu0 %1654
        %v1656 = vsel %vm1435, %v1648, 0.0
        %1657 = vadd.xlane.f32.xlu0 %v1656
        %v1658 = vpop.xlane.xlu0 %1657
        %v1659 = vsel %vm1435, %v1650, 0.0
        %1660 = vadd.xlane.f32.xlu0 %v1659
        %v1661 = vpop.xlane.xlu0 %1660
        %v1662 = vsel %vm1435, %v1652, 0.0
        %1663 = vadd.xlane.f32.xlu0 %v1662
        %v1664 = vpop.xlane.xlu0 %1663
        %v1665 = vrcp.pop %v1655
        %v1666 = vrcp.pop %v1658
        %v1667 = vrcp.pop %v1661
        %v1668 = vrcp.pop %v1664
        %v1669 = vmul.f32 %v1646, %v1665
        %v1670 = vmul.f32 %v1648, %v1666
        %v1671 = vmul.f32 %v1650, %v1667
        %v1672 = vmul.f32 %v1652, %v1668
        %v1673 = vsel %vm1435, %v1669, 0.0
        %v1674 = vsel %vm1435, %v1670, 0.0
        %v1675 = vadd.f32 %v1673, %v1674
        %v1676 = vsel %vm1435, %v1671, 0.0
        %v1677 = vadd.f32 %v1675, %v1676
        %v1678 = vsel %vm1435, %v1672, 0.0
        %v1679 = vadd.f32 %v1677, %v1678
        %v1680 = vmul.f32 %v1679, 0.25
        %v1681 = vpack.c.bf16 %v1680, %v1680
        %vm1682 = vcmask 60416
        %1683 = vst.msk [vmem:[%s777] sm:$0xf] %vm1682, %v1681
        %v1684 = vpack.c.bf16 %v1669, %v1669
        %v1685 = vpack.c.bf16 %v1670, %v1670
        %v1686 = vpack.c.bf16 %v1671, %v1671
        %v1687 = vpack.c.bf16 %v1672, %v1672
        %1688 = vrot.lane.b32.xlu0 %v1428, 64
        %v1689 = vpop.permute.xlu0 %1688
        %v1691 = vsel %vm1435, %v1684, 0
        %vm1693 = vcmask 1043456
        %v1695 = vsel %vm1693, %v1689, 0
        %1697 = vmatprep.subr.bf16.mxu0 0
        %1698 = vmatpush1.bf16.msra.mxu0 %v1695
        %1699 = vmatprep.subr.bf16.mxu0 0
        %1700 = vmatpush1.bf16.msra.mxu0 0
        %1701 = vmatprep.subr.bf16.mxu0 0
        %1702 = vmatpush1.bf16.msra.mxu0 0
        %1703 = vmatprep.subr.bf16.mxu0 0
        %1704 = vmatpush1.bf16.msra.mxu0 0
        %1705 = vmatprep.subr.bf16.mxu0 0
        %1706 = vmatpush1.bf16.msra.mxu0 0
        %1707 = vmatprep.subr.bf16.mxu0 0
        %1708 = vmatpush1.bf16.msra.mxu0 0
        %1709 = vmatprep.subr.bf16.mxu0 0
        %1710 = vmatpush1.bf16.msra.mxu0 0
        %1711 = vmatprep.subr.bf16.mxu0 0
        %1712 = vmatpush1.bf16.msra.mxu0 0
        %1713 = vmatprep.subr.bf16.mxu0 0
        %1714 = vmatpush1.bf16.msra.mxu0 0
        %1715 = vmatprep.subr.bf16.mxu0 0
        %1716 = vmatpush1.bf16.msra.mxu0 0
        %1717 = vmatprep.subr.bf16.mxu0 0
        %1718 = vmatpush1.bf16.msra.mxu0 0
        %1719 = vmatprep.subr.bf16.mxu0 0
        %1720 = vmatpush1.bf16.msra.mxu0 0
        %1721 = vmatprep.subr.bf16.mxu0 0
        %1722 = vmatpush1.bf16.msra.mxu0 0
        %1723 = vmatprep.subr.bf16.mxu0 0
        %1724 = vmatpush1.bf16.msra.mxu0 0
        %1725 = vmatprep.subr.bf16.mxu0 0
        %1726 = vmatpush1.bf16.msra.mxu0 0
        %1727 = vmatprep.subr.bf16.mxu0 0
        %1728 = vmatpush1.bf16.msra.mxu0 0
        %1729 = vmatprep.mubr.bf16.mxu0 0
        %1730 = vmatmul.mubr.bf16.gmra.mrb[0].mxu0 %v1691
        %v1731 = vpop.f32.mrb[0].mxu0
        %v1732 = vadd.f32 0.0, %v1731
        %v1733 = vpop.f32.mrb[0].mxu0
        %v1734 = vpop.f32.mrb[0].mxu0
        %v1735 = vpop.f32.mrb[0].mxu0
        %1736 = vdwg.mxu0
        %1737 = vrot.lane.b32.xlu0 %v1429, 64
        %v1738 = vpop.permute.xlu0 %1737
        %v1740 = vsel %vm1435, %v1685, 0
        %v1743 = vsel %vm1693, %v1738, 0
        %1745 = vmatprep.subr.bf16.mxu0 0
        %1746 = vmatpush1.bf16.msra.mxu0 %v1743
        %1747 = vmatprep.subr.bf16.mxu0 0
        %1748 = vmatpush1.bf16.msra.mxu0 0
        %1749 = vmatprep.subr.bf16.mxu0 0
        %1750 = vmatpush1.bf16.msra.mxu0 0
        %1751 = vmatprep.subr.bf16.mxu0 0
        %1752 = vmatpush1.bf16.msra.mxu0 0
        %1753 = vmatprep.subr.bf16.mxu0 0
        %1754 = vmatpush1.bf16.msra.mxu0 0
        %1755 = vmatprep.subr.bf16.mxu0 0
        %1756 = vmatpush1.bf16.msra.mxu0 0
        %1757 = vmatprep.subr.bf16.mxu0 0
        %1758 = vmatpush1.bf16.msra.mxu0 0
        %1759 = vmatprep.subr.bf16.mxu0 0
        %1760 = vmatpush1.bf16.msra.mxu0 0
        %1761 = vmatprep.subr.bf16.mxu0 0
        %1762 = vmatpush1.bf16.msra.mxu0 0
        %1763 = vmatprep.subr.bf16.mxu0 0
        %1764 = vmatpush1.bf16.msra.mxu0 0
        %1765 = vmatprep.subr.bf16.mxu0 0
        %1766 = vmatpush1.bf16.msra.mxu0 0
        %1767 = vmatprep.subr.bf16.mxu0 0
        %1768 = vmatpush1.bf16.msra.mxu0 0
        %1769 = vmatprep.subr.bf16.mxu0 0
        %1770 = vmatpush1.bf16.msra.mxu0 0
        %1771 = vmatprep.subr.bf16.mxu0 0
        %1772 = vmatpush1.bf16.msra.mxu0 0
        %1773 = vmatprep.subr.bf16.mxu0 0
        %1774 = vmatpush1.bf16.msra.mxu0 0
        %1775 = vmatprep.subr.bf16.mxu0 0
        %1776 = vmatpush1.bf16.msra.mxu0 0
        %1777 = vmatprep.mubr.bf16.mxu0 0
        %1778 = vmatmul.mubr.bf16.gmra.mrb[0].mxu0 %v1740
        %v1779 = vpop.f32.mrb[0].mxu0
        %v1780 = vadd.f32 0.0, %v1779
        %v1781 = vpop.f32.mrb[0].mxu0
        %v1782 = vpop.f32.mrb[0].mxu0
        %v1783 = vpop.f32.mrb[0].mxu0
        %1784 = vdwg.mxu0
        %1785 = vrot.lane.b32.xlu0 %v1430, 64
        %v1786 = vpop.permute.xlu0 %1785
        %v1788 = vsel %vm1435, %v1686, 0
        %v1791 = vsel %vm1693, %v1786, 0
        %1793 = vmatprep.subr.bf16.mxu0 0
        %1794 = vmatpush1.bf16.msra.mxu0 %v1791
        %1795 = vmatprep.subr.bf16.mxu0 0
        %1796 = vmatpush1.bf16.msra.mxu0 0
        %1797 = vmatprep.subr.bf16.mxu0 0
        %1798 = vmatpush1.bf16.msra.mxu0 0
        %1799 = vmatprep.subr.bf16.mxu0 0
        %1800 = vmatpush1.bf16.msra.mxu0 0
        %1801 = vmatprep.subr.bf16.mxu0 0
        %1802 = vmatpush1.bf16.msra.mxu0 0
        %1803 = vmatprep.subr.bf16.mxu0 0
        %1804 = vmatpush1.bf16.msra.mxu0 0
        %1805 = vmatprep.subr.bf16.mxu0 0
        %1806 = vmatpush1.bf16.msra.mxu0 0
        %1807 = vmatprep.subr.bf16.mxu0 0
        %1808 = vmatpush1.bf16.msra.mxu0 0
        %1809 = vmatprep.subr.bf16.mxu0 0
        %1810 = vmatpush1.bf16.msra.mxu0 0
        %1811 = vmatprep.subr.bf16.mxu0 0
        %1812 = vmatpush1.bf16.msra.mxu0 0
        %1813 = vmatprep.subr.bf16.mxu0 0
        %1814 = vmatpush1.bf16.msra.mxu0 0
        %1815 = vmatprep.subr.bf16.mxu0 0
        %1816 = vmatpush1.bf16.msra.mxu0 0
        %1817 = vmatprep.subr.bf16.mxu0 0
        %1818 = vmatpush1.bf16.msra.mxu0 0
        %1819 = vmatprep.subr.bf16.mxu0 0
        %1820 = vmatpush1.bf16.msra.mxu0 0
        %1821 = vmatprep.subr.bf16.mxu0 0
        %1822 = vmatpush1.bf16.msra.mxu0 0
        %1823 = vmatprep.subr.bf16.mxu0 0
        %1824 = vmatpush1.bf16.msra.mxu0 0
        %1825 = vmatprep.mubr.bf16.mxu0 0
        %1826 = vmatmul.mubr.bf16.gmra.mrb[0].mxu0 %v1788
        %v1827 = vpop.f32.mrb[0].mxu0
        %v1828 = vadd.f32 0.0, %v1827
        %v1829 = vpop.f32.mrb[0].mxu0
        %v1830 = vpop.f32.mrb[0].mxu0
        %v1831 = vpop.f32.mrb[0].mxu0
        %1832 = vdwg.mxu0
        %1833 = vrot.lane.b32.xlu0 %v1431, 64
        %v1834 = vpop.permute.xlu0 %1833
        %v1836 = vsel %vm1435, %v1687, 0
        %v1839 = vsel %vm1693, %v1834, 0
        %1841 = vmatprep.subr.bf16.mxu0 0
        %1842 = vmatpush1.bf16.msra.mxu0 %v1839
        %1843 = vmatprep.subr.bf16.mxu0 0
        %1844 = vmatpush1.bf16.msra.mxu0 0
        %1845 = vmatprep.subr.bf16.mxu0 0
        %1846 = vmatpush1.bf16.msra.mxu0 0
        %1847 = vmatprep.subr.bf16.mxu0 0
        %1848 = vmatpush1.bf16.msra.mxu0 0
        %1849 = vmatprep.subr.bf16.mxu0 0
        %1850 = vmatpush1.bf16.msra.mxu0 0
        %1851 = vmatprep.subr.bf16.mxu0 0
        %1852 = vmatpush1.bf16.msra.mxu0 0
        %1853 = vmatprep.subr.bf16.mxu0 0
        %1854 = vmatpush1.bf16.msra.mxu0 0
        %1855 = vmatprep.subr.bf16.mxu0 0
        %1856 = vmatpush1.bf16.msra.mxu0 0
        %1857 = vmatprep.subr.bf16.mxu0 0
        %1858 = vmatpush1.bf16.msra.mxu0 0
        %1859 = vmatprep.subr.bf16.mxu0 0
        %1860 = vmatpush1.bf16.msra.mxu0 0
        %1861 = vmatprep.subr.bf16.mxu0 0
        %1862 = vmatpush1.bf16.msra.mxu0 0
        %1863 = vmatprep.subr.bf16.mxu0 0
        %1864 = vmatpush1.bf16.msra.mxu0 0
        %1865 = vmatprep.subr.bf16.mxu0 0
        %1866 = vmatpush1.bf16.msra.mxu0 0
        %1867 = vmatprep.subr.bf16.mxu0 0
        %1868 = vmatpush1.bf16.msra.mxu0 0
        %1869 = vmatprep.subr.bf16.mxu0 0
        %1870 = vmatpush1.bf16.msra.mxu0 0
        %1871 = vmatprep.subr.bf16.mxu0 0
        %1872 = vmatpush1.bf16.msra.mxu0 0
        %1873 = vmatprep.mubr.bf16.mxu0 0
        %1874 = vmatmul.mubr.bf16.gmra.mrb[0].mxu0 %v1836
        %v1875 = vpop.f32.mrb[0].mxu0
        %v1876 = vadd.f32 0.0, %v1875
        %v1877 = vpop.f32.mrb[0].mxu0
        %v1878 = vpop.f32.mrb[0].mxu0
        %v1879 = vpop.f32.mrb[0].mxu0
        %1880 = vdwg.mxu0
        %1882 = vrot.lane.b32.xlu0 %v1780, 8
        %v1883 = vpop.permute.xlu0 %1882
        %1886 = vrot.lane.b32.xlu0 %v1828, 16
        %v1887 = vpop.permute.xlu0 %1886
        %1890 = vrot.lane.b32.xlu0 %v1876, 24
        %v1891 = vpop.permute.xlu0 %1890
        %v1893 = vsel %vm1435, %v1732, %v1883
        %vm1894 = vcmask 130048
        %v1895 = vsel %vm1894, %v1893, %v1887
        %vm1896 = vcmask 195584
        %v1897 = vsel %vm1896, %v1895, %v1891
        %v1898 = vpack.c.bf16 %v1897, %v1897
        %v1899 = vld [vmem:[%s795] sm:$0xf]
        %v1900 = vld [vmem:[%s795 + $0x4] sm:$0xf]
        %v1901 = vld [vmem:[%s795 + $0x8] sm:$0xf]
        %v1902 = vld [vmem:[%s795 + $0xc] sm:$0xf]
        %v1903 = vld [vmem:[%s798] sm:$0x1]
        %v1905 = vlaneseq
        %v1906 = vshrl.u32 %v1905, 7
        %v1907 = vsub.s32 0, %v1906
        %v1908 = vrot.slane %v1903, %v1907
        %v1914 = vunpack.c.l.b16 %v1899
        %v1915 = vunpack.c.l.b16 %v1900
        %v1916 = vunpack.c.l.b16 %v1901
        %v1917 = vunpack.c.l.b16 %v1902
        %v1918 = vpack.c.b16 %v1915, %v1914
        %v1919 = vpack.c.b16 %v1917, %v1916
        %v1923 = vsel %vm1374, %v1898, 0
        %1925 = vmatprep.subr.bf16.mxu0 0
        %1926 = vmatpush1.bf16.msra.mxu0 %v1918
        %1927 = vmatprep.subr.bf16.mxu0 0
        %1928 = vmatpush1.bf16.msra.mxu0 %v1919
        %1929 = vmatprep.subr.bf16.mxu0 0
        %1930 = vmatpush1.bf16.msra.mxu0 0
        %1931 = vmatprep.subr.bf16.mxu0 0
        %1932 = vmatpush1.bf16.msra.mxu0 0
        %1933 = vmatprep.subr.bf16.mxu0 0
        %1934 = vmatpush1.bf16.msra.mxu0 0
        %1935 = vmatprep.subr.bf16.mxu0 0
        %1936 = vmatpush1.bf16.msra.mxu0 0
        %1937 = vmatprep.subr.bf16.mxu0 0
        %1938 = vmatpush1.bf16.msra.mxu0 0
        %1939 = vmatprep.subr.bf16.mxu0 0
        %1940 = vmatpush1.bf16.msra.mxu0 0
        %1941 = vmatprep.subr.bf16.mxu0 0
        %1942 = vmatpush1.bf16.msra.mxu0 0
        %1943 = vmatprep.subr.bf16.mxu0 0
        %1944 = vmatpush1.bf16.msra.mxu0 0
        %1945 = vmatprep.subr.bf16.mxu0 0
        %1946 = vmatpush1.bf16.msra.mxu0 0
        %1947 = vmatprep.subr.bf16.mxu0 0
        %1948 = vmatpush1.bf16.msra.mxu0 0
        %1949 = vmatprep.subr.bf16.mxu0 0
        %1950 = vmatpush1.bf16.msra.mxu0 0
        %1951 = vmatprep.subr.bf16.mxu0 0
        %1952 = vmatpush1.bf16.msra.mxu0 0
        %1953 = vmatprep.subr.bf16.mxu0 0
        %1954 = vmatpush1.bf16.msra.mxu0 0
        %1955 = vmatprep.subr.bf16.mxu0 0
        %1956 = vmatpush1.bf16.msra.mxu0 0
        %1957 = vmatprep.mubr.bf16.mxu0 0
        %1958 = vmatmul.mubr.bf16.gmra.mrb[0].mxu0 %v1923
        %v1959 = vpop.f32.mrb[0].mxu0
        %v1960 = vadd.f32 %v1908, %v1959
        %v1961 = vpop.f32.mrb[0].mxu0
        %v1962 = vpop.f32.mrb[0].mxu0
        %v1963 = vpop.f32.mrb[0].mxu0
        %1964 = vdwg.mxu0
        %v1965 = vadd.f32 %v1349, %v1960
        %v1966 = vld [vmem:[%s801] sm:$0x1]
        %v1967 = vld [vmem:[%s804] sm:$0x1]
        %v1968 = vsel %vm1374, %v1965, 0.0
        %1969 = vadd.xlane.f32.xlu0 %v1968
        %v1970 = vpop.xlane.xlu0 %1969
        %v1971 = vrcp.pop 32.0
        %v1972 = vmul.f32 %v1970, %v1971
        %v1973 = vsub.f32 %v1965, %v1972
        %v1974 = vmul.f32 %v1973, %v1973
        %v1975 = vsel %vm1374, %v1974, 0.0
        %1976 = vadd.xlane.f32.xlu0 %v1975
        %v1977 = vpop.xlane.xlu0 %1976
        %v1978 = vmul.f32 %v1977, %v1971
        %v1979 = vadd.f32 %v1978, 1e-05
        %v1980 = vrsqrt.pop %v1979
        %v1981 = vmul.f32 %v1973, %v1980
        %v1983 = vlaneseq
        %v1984 = vshrl.u32 %v1983, 7
        %v1985 = vsub.s32 0, %v1984
        %v1986 = vrot.slane %v1966, %v1985
        %v1988 = vmul.f32 %v1981, %v1986
        %v1990 = vlaneseq
        %v1991 = vshrl.u32 %v1990, 7
        %v1992 = vsub.s32 0, %v1991
        %v1993 = vrot.slane %v1967, %v1992
        %v1995 = vadd.f32 %v1988, %v1993
        %v1996 = vpack.c.bf16 %v1995, %v1995
        %v1997 = vld [vmem:[%s809] sm:$0xf]
        %v1998 = vld [vmem:[%s809 + $0x4] sm:$0xf]
        %v1999 = vld [vmem:[%s809 + $0x8] sm:$0xf]
        %v2000 = vld [vmem:[%s809 + $0xc] sm:$0xf]
        %v2001 = vld [vmem:[%s812] sm:$0x1]
        %v2003 = vlaneseq
        %v2004 = vshrl.u32 %v2003, 7
        %v2005 = vsub.s32 0, %v2004
        %v2006 = vrot.slane %v2001, %v2005
        %v2012 = vunpack.c.l.b16 %v1997
        %v2013 = vunpack.c.l.b16 %v1998
        %v2014 = vunpack.c.l.b16 %v1999
        %v2015 = vunpack.c.l.b16 %v2000
        %v2016 = vpack.c.b16 %v2013, %v2012
        %v2017 = vpack.c.b16 %v2015, %v2014
        %v2021 = vsel %vm1374, %v1996, 0
        %2023 = vmatprep.subr.bf16.mxu0 0
        %2024 = vmatpush1.bf16.msra.mxu0 %v2016
        %2025 = vmatprep.subr.bf16.mxu0 0
        %2026 = vmatpush1.bf16.msra.mxu0 %v2017
        %2027 = vmatprep.subr.bf16.mxu0 0
        %2028 = vmatpush1.bf16.msra.mxu0 0
        %2029 = vmatprep.subr.bf16.mxu0 0
        %2030 = vmatpush1.bf16.msra.mxu0 0
        %2031 = vmatprep.subr.bf16.mxu0 0
        %2032 = vmatpush1.bf16.msra.mxu0 0
        %2033 = vmatprep.subr.bf16.mxu0 0
        %2034 = vmatpush1.bf16.msra.mxu0 0
        %2035 = vmatprep.subr.bf16.mxu0 0
        %2036 = vmatpush1.bf16.msra.mxu0 0
        %2037 = vmatprep.subr.bf16.mxu0 0
        %2038 = vmatpush1.bf16.msra.mxu0 0
        %2039 = vmatprep.subr.bf16.mxu0 0
        %2040 = vmatpush1.bf16.msra.mxu0 0
        %2041 = vmatprep.subr.bf16.mxu0 0
        %2042 = vmatpush1.bf16.msra.mxu0 0
        %2043 = vmatprep.subr.bf16.mxu0 0
        %2044 = vmatpush1.bf16.msra.mxu0 0
        %2045 = vmatprep.subr.bf16.mxu0 0
        %2046 = vmatpush1.bf16.msra.mxu0 0
        %2047 = vmatprep.subr.bf16.mxu0 0
        %2048 = vmatpush1.bf16.msra.mxu0 0
        %2049 = vmatprep.subr.bf16.mxu0 0
        %2050 = vmatpush1.bf16.msra.mxu0 0
        %2051 = vmatprep.subr.bf16.mxu0 0
        %2052 = vmatpush1.bf16.msra.mxu0 0
        %2053 = vmatprep.subr.bf16.mxu0 0
        %2054 = vmatpush1.bf16.msra.mxu0 0
        %2055 = vmatprep.mubr.bf16.mxu0 0
        %2056 = vmatmul.mubr.bf16.gmra.mrb[0].mxu0 %v2021
        %v2057 = vpop.f32.mrb[0].mxu0
        %v2058 = vadd.f32 %v2006, %v2057
        %v2059 = vpop.f32.mrb[0].mxu0
        %v2060 = vpop.f32.mrb[0].mxu0
        %v2061 = vpop.f32.mrb[0].mxu0
        %2062 = vdwg.mxu0
        %v2063 = vmax.f32 %v2058, 0.0
        %v2064 = vpack.c.bf16 %v2063, %v2063
        %v2065 = vld [vmem:[%s817] sm:$0xf]
        %v2066 = vld [vmem:[%s817 + $0x4] sm:$0xf]
        %v2067 = vld [vmem:[%s817 + $0x8] sm:$0xf]
        %v2068 = vld [vmem:[%s817 + $0xc] sm:$0xf]
        %v2069 = vld [vmem:[%s817 + $0x10] sm:$0xf]
        %v2070 = vld [vmem:[%s817 + $0x14] sm:$0xf]
        %v2071 = vld [vmem:[%s817 + $0x18] sm:$0xf]
        %v2072 = vld [vmem:[%s817 + $0x1c] sm:$0xf]
        %v2073 = vld [vmem:[%s817 + $0x20] sm:$0xf]
        %v2074 = vld [vmem:[%s817 + $0x24] sm:$0xf]
        %v2075 = vld [vmem:[%s817 + $0x28] sm:$0xf]
        %v2076 = vld [vmem:[%s817 + $0x2c] sm:$0xf]
        %v2077 = vld [vmem:[%s817 + $0x30] sm:$0xf]
        %v2078 = vld [vmem:[%s817 + $0x34] sm:$0xf]
        %v2079 = vld [vmem:[%s817 + $0x38] sm:$0xf]
        %v2080 = vld [vmem:[%s817 + $0x3c] sm:$0xf]
        %v2081 = vld [vmem:[%s820] sm:$0x1]
        %v2083 = vlaneseq
        %v2084 = vshrl.u32 %v2083, 7
        %v2085 = vsub.s32 0, %v2084
        %v2086 = vrot.slane %v2081, %v2085
        %v2104 = vunpack.c.l.b16 %v2065
        %v2105 = vunpack.c.l.b16 %v2066
        %v2106 = vunpack.c.l.b16 %v2067
        %v2107 = vunpack.c.l.b16 %v2068
        %v2108 = vunpack.c.l.b16 %v2069
        %v2109 = vunpack.c.l.b16 %v2070
        %v2110 = vunpack.c.l.b16 %v2071
        %v2111 = vunpack.c.l.b16 %v2072
        %v2112 = vunpack.c.l.b16 %v2073
        %v2113 = vunpack.c.l.b16 %v2074
        %v2114 = vunpack.c.l.b16 %v2075
        %v2115 = vunpack.c.l.b16 %v2076
        %v2116 = vunpack.c.l.b16 %v2077
        %v2117 = vunpack.c.l.b16 %v2078
        %v2118 = vunpack.c.l.b16 %v2079
        %v2119 = vunpack.c.l.b16 %v2080
        %v2120 = vpack.c.b16 %v2105, %v2104
        %v2121 = vpack.c.b16 %v2107, %v2106
        %v2122 = vpack.c.b16 %v2109, %v2108
        %v2123 = vpack.c.b16 %v2111, %v2110
        %v2124 = vpack.c.b16 %v2113, %v2112
        %v2125 = vpack.c.b16 %v2115, %v2114
        %v2126 = vpack.c.b16 %v2117, %v2116
        %v2127 = vpack.c.b16 %v2119, %v2118
        %2136 = vmatprep.subr.bf16.mxu0 0
        %2137 = vmatpush1.bf16.msra.mxu0 %v2120
        %2138 = vmatprep.subr.bf16.mxu0 0
        %2139 = vmatpush1.bf16.msra.mxu0 %v2121
        %2140 = vmatprep.subr.bf16.mxu0 0
        %2141 = vmatpush1.bf16.msra.mxu0 %v2122
        %2142 = vmatprep.subr.bf16.mxu0 0
        %2143 = vmatpush1.bf16.msra.mxu0 %v2123
        %2144 = vmatprep.subr.bf16.mxu0 0
        %2145 = vmatpush1.bf16.msra.mxu0 %v2124
        %2146 = vmatprep.subr.bf16.mxu0 0
        %2147 = vmatpush1.bf16.msra.mxu0 %v2125
        %2148 = vmatprep.subr.bf16.mxu0 0
        %2149 = vmatpush1.bf16.msra.mxu0 %v2126
        %2150 = vmatprep.subr.bf16.mxu0 0
        %2151 = vmatpush1.bf16.msra.mxu0 %v2127
        %2152 = vmatprep.subr.bf16.mxu0 0
        %2153 = vmatpush1.bf16.msra.mxu0 0
        %2154 = vmatprep.subr.bf16.mxu0 0
        %2155 = vmatpush1.bf16.msra.mxu0 0
        %2156 = vmatprep.subr.bf16.mxu0 0
        %2157 = vmatpush1.bf16.msra.mxu0 0
        %2158 = vmatprep.subr.bf16.mxu0 0
        %2159 = vmatpush1.bf16.msra.mxu0 0
        %2160 = vmatprep.subr.bf16.mxu0 0
        %2161 = vmatpush1.bf16.msra.mxu0 0
        %2162 = vmatprep.subr.bf16.mxu0 0
        %2163 = vmatpush1.bf16.msra.mxu0 0
        %2164 = vmatprep.subr.bf16.mxu0 0
        %2165 = vmatpush1.bf16.msra.mxu0 0
        %2166 = vmatprep.subr.bf16.mxu0 0
        %2167 = vmatpush1.bf16.msra.mxu0 0
        %2168 = vmatprep.mubr.bf16.mxu0 0
        %2169 = vmatmul.mubr.bf16.gmra.mrb[0].mxu0 %v2064
        %v2170 = vpop.f32.mrb[0].mxu0
        %v2171 = vadd.f32 %v2086, %v2170
        %v2172 = vpop.f32.mrb[0].mxu0
        %v2173 = vpop.f32.mrb[0].mxu0
        %v2174 = vpop.f32.mrb[0].mxu0
        %2175 = vdwg.mxu0
        %v2176 = vadd.f32 %v1995, %v2171
        %v2177 = vld [vmem:[%s823] sm:$0x1]
        %v2178 = vld [vmem:[%s826] sm:$0x1]
        %v2179 = vsel %vm1374, %v2176, 0.0
        %2180 = vadd.xlane.f32.xlu0 %v2179
        %v2181 = vpop.xlane.xlu0 %2180
        %v2182 = vmul.f32 %v2181, %v1971
        %v2183 = vsub.f32 %v2176, %v2182
        %v2184 = vmul.f32 %v2183, %v2183
        %v2185 = vsel %vm1374, %v2184, 0.0
        %2186 = vadd.xlane.f32.xlu0 %v2185
        %v2187 = vpop.xlane.xlu0 %2186
        %v2188 = vmul.f32 %v2187, %v1971
        %v2189 = vadd.f32 %v2188, 1e-05
        %v2190 = vrsqrt.pop %v2189
        %v2191 = vmul.f32 %v2183, %v2190
        %v2193 = vlaneseq
        %v2194 = vshrl.u32 %v2193, 7
        %v2195 = vsub.s32 0, %v2194
        %v2196 = vrot.slane %v2177, %v2195
        %v2198 = vmul.f32 %v2191, %v2196
        %v2200 = vlaneseq
        %v2201 = vshrl.u32 %v2200, 7
        %v2202 = vsub.s32 0, %v2201
        %v2203 = vrot.slane %v2178, %v2202
        %v2205 = vadd.f32 %v2198, %v2203
        %2206 = vst.msk [vmem:[#allocation2] sm:$0xff] %vm1374, %v2205
        %v2207 = vpack.c.bf16 %v2205, %v2205
        %vm2208 = vcmask 257024
        %2209 = vst.msk [vmem:[%s770] sm:$0xf] %vm2208, %v2207
        %2210 = vst.msk [vmem:[%s763] sm:$0xff] %vm1374, %v2205
        %s2211 = sand.u32 %s479, 1
        %s2212 = scalar_lea.sflag [#allocation4], %s2211
        %s2213 = sand.u32 %s479, 1
        %s2214 = smul.addr %s2213, 8
        %s2215 = scalar_lea.vmem [#allocation3], %s2214
        %s2216 = sand.u32 %s37, 1
        %s2217 = scalar_lea.sflag [#allocation6], %s2216
        %s2218 = sand.u32 %s507, 1
        %s2219 = smul.addr %s2218, 4
        %s2220 = scalar_lea.vmem [#allocation5], %s2219
        %s2221 = sand.u32 %s37, 1
        %s2222 = scalar_lea.sflag [#allocation6], %s2221
        %s2223 = sand.u32 %s535, 1
        %s2224 = smul.addr %s2223, 4
        %s2225 = scalar_lea.vmem [#allocation7], %s2224
        // Predicated region
        $region93: #{tpu_custom_call.1} parent=87 // pred_check
          %p2226 = pneg %p489
        $region94: #{tpu_custom_call.1} parent=87 // pred_check_branch
          %2228 = sbr.rel (%p2226) target = $region96
        $region95: #{tpu_custom_call.1} parent=87 // pred_region
          %s2230 = ssub.s32 128, 128
          %2231 = vsyncadd %s2212, %s2230
          %s2232 = smul.addr %s41, 128
          %s2233 = scalar_lea.hbm %s17, %s2232
          %s2235 = sshll.u32 %s2215, 4
          %s2236 = int_to_ptr.vmem [resolvable:$true] %s2235
          %2238 = dma.vmem_to_hbm [thread:$0]  %s2236, 128, %s2233, %s2212
        $region96: #{tpu_custom_call.1} parent=87 // pred_fallthru
          _
        // Predicated region
        $region97: #{tpu_custom_call.1} parent=87 // pred_check
          %p2239 = pneg %p517
        $region98: #{tpu_custom_call.1} parent=87 // pred_check_branch
          %2241 = sbr.rel (%p2239) target = $region100
        $region99: #{tpu_custom_call.1} parent=87 // pred_region
          %s2243 = ssub.s32 64, 64
          %2244 = vsyncadd %s2217, %s2243
          %s2245 = smul.addr %s41, 2
          %s2246 = sadd.s32 %s42, %s2245
          %s2247 = smul.addr %s2246, 64
          %s2248 = scalar_lea.hbm %s18, %s2247
          %s2250 = sshll.u32 %s2220, 4
          %s2251 = int_to_ptr.vmem [resolvable:$true] %s2250
          %2253 = dma.vmem_to_hbm [thread:$0]  %s2251, 64, %s2248, %s2217
        $region100: #{tpu_custom_call.1} parent=87 // pred_fallthru
          _
        // Predicated region
        $region101: #{tpu_custom_call.1} parent=87 // pred_check
          %p2254 = pneg %p545
        $region102: #{tpu_custom_call.1} parent=87 // pred_check_branch
          %2256 = sbr.rel (%p2254) target = $region104
        $region103: #{tpu_custom_call.1} parent=87 // pred_region
          %s2258 = ssub.s32 64, 64
          %2259 = vsyncadd %s2222, %s2258
          %s2260 = smul.addr %s41, 2
          %s2261 = sadd.s32 %s42, %s2260
          %s2262 = smul.addr %s2261, 64
          %s2263 = scalar_lea.hbm %s19, %s2262
          %s2265 = sshll.u32 %s2225, 4
          %s2266 = int_to_ptr.vmem [resolvable:$true] %s2265
          %2268 = dma.vmem_to_hbm [thread:$0]  %s2266, 64, %s2263, %s2222
        $region104: #{tpu_custom_call.1} parent=87 // pred_fallthru
          _
      $region88: #{tpu_custom_call.1} parent=5 // pred_fallthru
        _
      %p2269 = scmp.le.s32.totalorder 2, %s32
      // Predicated region
      $region105: #{tpu_custom_call.1} parent=5 // pred_check
        %p2270 = pneg %p2269
      $region106: #{tpu_custom_call.1} parent=5 // pred_check_branch
        %2272 = sbr.rel (%p2270) target = $region108
      $region107: #{tpu_custom_call.1} parent=5 // pred_region
        %s2273 = ssub.s32 %s32, 2
        // Predicated region
        $region109: #{tpu_custom_call.1} parent=107 // pred_check
          %p2274 = pneg %p495
        $region110: #{tpu_custom_call.1} parent=107 // pred_check_branch
          %2276 = sbr.rel (%p2274) target = $region112
        $region111: #{tpu_custom_call.1} parent=107 // pred_region
          %s2277 = sand.u32 %s480, 1
          %s2278 = scalar_lea.sflag [#allocation4], %s2277
          %s2279 = sand.u32 %s480, 1
          %s2280 = smul.addr %s2279, 8
          %s2281 = scalar_lea.vmem [#allocation3], %s2280
          %2282 = dma.done %s2278, 128
        $region112: #{tpu_custom_call.1} parent=107 // pred_fallthru
          _
        // Predicated region
        $region113: #{tpu_custom_call.1} parent=107 // pred_check
          %p2283 = pneg %p523
        $region114: #{tpu_custom_call.1} parent=107 // pred_check_branch
          %2285 = sbr.rel (%p2283) target = $region116
        $region115: #{tpu_custom_call.1} parent=107 // pred_region
          %s2286 = sand.u32 %s38, 1
          %s2287 = scalar_lea.sflag [#allocation6], %s2286
          %s2288 = sand.u32 %s508, 1
          %s2289 = smul.addr %s2288, 4
          %s2290 = scalar_lea.vmem [#allocation5], %s2289
          %2291 = dma.done %s2287, 64
        $region116: #{tpu_custom_call.1} parent=107 // pred_fallthru
          _
        // Predicated region
        $region117: #{tpu_custom_call.1} parent=107 // pred_check
          %p2292 = pneg %p551
        $region118: #{tpu_custom_call.1} parent=107 // pred_check_branch
          %2294 = sbr.rel (%p2292) target = $region120
        $region119: #{tpu_custom_call.1} parent=107 // pred_region
          %s2295 = sand.u32 %s38, 1
          %s2296 = scalar_lea.sflag [#allocation6], %s2295
          %s2297 = sand.u32 %s536, 1
          %s2298 = smul.addr %s2297, 4
          %s2299 = scalar_lea.vmem [#allocation7], %s2298
          %2300 = dma.done %s2296, 64
        $region120: #{tpu_custom_call.1} parent=107 // pred_fallthru
          _
      $region108: #{tpu_custom_call.1} parent=5 // pred_fallthru
        _
    $region6: #{tpu_custom_call.1} parent=1 // loop_footer
      %s36 = sadd.s32 1, %s32
    $region7: #{tpu_custom_call.1} parent=1 // loop_footer_branch
      %31 = sbr.rel target = $region3
    $region8: #{tpu_custom_call.1} parent=1 // loop_exit
      _
    %2301 = vsyncpa [#allocation4], 1
    %s2302 = scalar_lea.sflag [#allocation4], 1
    %2303 = vsyncpa %s2302, 1
    %2304 = vsyncpa [#allocation6], 1
    %s2305 = scalar_lea.sflag [#allocation6], 1
    %2306 = vsyncpa %s2305, 1

</llo_original>
